<compile_context>
chip_gen: v7x
topology: tpu7x:2x2x1
jax: 0.10.0
libtpu: 0.0.40
codegen_flags: <defaults>
</compile_context>

<pallas_src>
import numpy as np
import jax
import jax.numpy as jnp
from jax import lax
from jax.experimental import pallas as pl
from jax.experimental.pallas import tpu as pltpu

# ------------------------- model configuration -------------------------
F1, K1 = 16, 5                 # conv1: Conv1d(1, 16, 5)
F2, K2 = 8, 7                  # conv2: Conv1d(16, 8, 7)
SPIKE_SIZE = 40                # denoiser.out.out_features
T0, T1_RANGE = 10, 26          # output_t_range
C_OUT = T1_RANGE - T0          # conv_linear out_channels = 16
K3 = SPIKE_SIZE - K1 - K2 + 2  # conv_linear kernel_size  = 30

K_HALO = (K1 - 1) + (K2 - 1) + (K3 - 1)   # 39 samples consumed by the 3 convs
LANE_PAD = 128                            # tail pad on the lane axis (>= K_HALO)
LS = 512                                  # lanes per in-kernel strip
TAP_CHUNK = 8                             # conv_linear taps per accumulated matmul
MAX_L0 = 8192                             # target lanes per grid step


def detect_kernel(x_ref, w1_ref, b1_ref, w2c_ref, b2_ref, w3c_ref, b3_ref, o_ref):
    """One block of samples flattened onto the lane axis, strip-mined.

    x_ref : (1, L0 + LANE_PAD) f32   flattened samples + zero tail pad
    o_ref : (1, L0)            f32   PTP over conv channels (per-sample tails
                                     are garbage and cropped by the wrapper)
    """
    L0 = o_ref.shape[-1]
    num_strips = L0 // LS
    L1S = LS + (K2 - 1) + (K3 - 1)    # conv1 output lanes needed per strip
    L2S = LS + (K3 - 1)               # conv2 output lanes needed per strip

    w1 = w1_ref[...]                  # (F1, K1)       f32
    b1 = b1_ref[...]                  # (F1, 1)        f32
    w2c = w2c_ref[...]                # (F2, F1*K2)    bf16
    b2 = b2_ref[...]                  # (F2, 1)        f32
    w3c = w3c_ref[...]                # (C_OUT, F2*K3) bf16
    b3 = b3_ref[...]                  # (C_OUT, 1)     f32

    # Static per-chunk conv_linear weight slices, hoisted out of the strip loop.
    w3_chunks = []
    for c0 in range(0, K3, TAP_CHUNK):
        nk = min(TAP_CHUNK, K3 - c0)
        w3_chunks.append((c0, nk, w3c[:, c0 * F2:(c0 + nk) * F2]))

    def strip_body(s, carry):
        start = pl.multiple_of(s * LS, 128)
        xs = x_ref[:, pl.ds(start, LS + K_HALO)]               # (1, LS+39) f32

        # conv1 + ReLU (in_channels == 1): per-tap broadcast MACs on the VPU, f32.
        acc1 = w1[:, 0:1] * xs[:, 0:L1S]
        for k in range(1, K1):
            acc1 = acc1 + w1[:, k:k + 1] * xs[:, k:k + L1S]
        y1 = jnp.maximum(acc1 + b1, 0.0).astype(jnp.bfloat16)  # (F1, L1S)

        # conv2 + ReLU: im2col -> one (F2, 112) @ (112, L2S) bf16 matmul, f32 acc.
        y1_col = jnp.concatenate([y1[:, k:k + L2S] for k in range(K2)], axis=0)
        z2 = jnp.dot(w2c, y1_col, preferred_element_type=jnp.float32)
        y2 = jnp.maximum(z2 + b2, 0.0)                          # (F2, L2S) f32

        # conv_linear: tap-chunked im2col matmuls accumulated in f32
        # (never materializes the full (F2*K3, LS) slab).
        acc3 = jnp.zeros((C_OUT, LS), jnp.float32)
        for c0, nk, w3_blk in w3_chunks:
            y2_col = jnp.concatenate(
                [y2[:, c0 + k:c0 + k + LS] for k in range(nk)],
                axis=0).astype(jnp.bfloat16)                    # (F2*nk, LS)
            acc3 = acc3 + jnp.dot(w3_blk, y2_col,
                                  preferred_element_type=jnp.float32)
        y3 = acc3 + b3                                          # (C_OUT, LS)

        # PeakToPeak over the channel (sublane) axis.
        ptp = (jnp.max(y3, axis=0, keepdims=True)
               - jnp.min(y3, axis=0, keepdims=True))            # (1, LS)
        o_ref[:, pl.ds(start, LS)] = ptp.astype(o_ref.dtype)
        return carry

    lax.fori_loop(0, num_strips, strip_body, 0)


def _full_spec(shape):
    """Whole-array (un-tiled) block spec."""
    nd = len(shape)
    return pl.BlockSpec(shape, lambda g, nd=nd: (0,) * nd)


def _detect_blocks(x2d, params):
    """x2d: (M, Ts) float32 sample rows. Returns (M, Ts - K_HALO)."""
    w1, b1, w2, b2, w3, b3 = params
    M, Ts = x2d.shape
    t_out = Ts - K_HALO

    # Samples per grid step: fill the lane budget, but keep >= 2 grid steps
    # when the batch allows it so v7x can split the grid across its 2 TCs.
    nb_fit = max(8, ((MAX_L0 // Ts) // 8) * 8)
    nb_need = -(-M // 8) * 8
    NB = max(8, min(nb_fit, nb_need))
    if -(-M // NB) < 2 and NB > 8:
        NB = max(8, ((NB // 2 + 7) // 8) * 8)
    G = -(-M // NB)
    M_pad = G * NB
    L0 = NB * Ts
    L0_blk = -(-L0 // LS) * LS            # strip-aligned block length

    # Plain-JAX glue: pad batch, flatten each NB-sample block onto the lane
    # axis, tail-pad so every strip's halo read stays in-bounds.
    if M_pad != M:
        x2d = jnp.pad(x2d, ((0, M_pad - M), (0, 0)))
    x_flat = jnp.pad(x2d.reshape(G, L0),
                     ((0, 0), (0, L0_blk + LANE_PAD - L0)))[:, None, :]

    # Weights: pre-reshape for the im2col matmuls (row order = (k, f));
    # MXU operands in bf16, everything else f32.
    w1_2d = jnp.asarray(w1, jnp.float32).reshape(F1, K1)
    b1_c = jnp.asarray(b1, jnp.float32).reshape(F1, 1)
    w2_col = jnp.transpose(jnp.asarray(w2, jnp.float32), (0, 2, 1)) \
        .reshape(F2, K2 * F1).astype(jnp.bfloat16)
    b2_c = jnp.asarray(b2, jnp.float32).reshape(F2, 1)
    w3_col = jnp.transpose(jnp.asarray(w3, jnp.float32), (0, 2, 1)) \
        .reshape(C_OUT, K3 * F2).astype(jnp.bfloat16)
    b3_c = jnp.asarray(b3, jnp.float32).reshape(C_OUT, 1)

    # VMEM limit from the actual buffer math (double-buffered blocks) + headroom.
    vmem_bytes = 4 * (2 * (L0_blk + LANE_PAD) + 2 * L0_blk) + (4 << 20)
    vmem_limit = int(min(64 << 20, max(16 << 20, vmem_bytes)))

    out = pl.pallas_call(
        detect_kernel,
        out_shape=jax.ShapeDtypeStruct((G, 1, L0_blk), jnp.float32),
        grid=(G,),
        in_specs=[
            pl.BlockSpec((None, 1, L0_blk + LANE_PAD), lambda g: (g, 0, 0)),
            _full_spec((F1, K1)),
            _full_spec((F1, 1)),
            _full_spec((F2, K2 * F1)),
            _full_spec((F2, 1)),
            _full_spec((C_OUT, K3 * F2)),
            _full_spec((C_OUT, 1)),
        ],
        out_specs=pl.BlockSpec((None, 1, L0_blk), lambda g: (g, 0, 0)),
        compiler_params=pltpu.CompilerParams(
            dimension_semantics=("parallel",),
            vmem_limit_bytes=vmem_limit,
        ),
    )(x_flat, w1_2d, b1_c, w2_col, b2_c, w3_col, b3_c)

    # Crop lane padding, per-sample garbage tails and batch-padding rows.
    return out[:, 0, :L0].reshape(M_pad, Ts)[:M, :t_out]


def denoiser_detect(x, params, *, t_window=2048):
    """x: (N, 1, T) float32 (NCW, like PyTorch). Returns (N, T - 39).

    Long samples (t_out > t_window) are split into overlapping time windows
    (39-sample halo) in plain JAX so a single pallas_call with bounded per-step
    VMEM handles arbitrarily long inputs.
    """
    N, c, T = x.shape
    assert c == 1, "expected single-channel NCW input"
    t_out = T - K_HALO
    if t_out <= 0:
        raise ValueError(f"T={T} too short; need T >= {K_HALO + 1}")
    x2d = x.reshape(N, T).astype(jnp.float32)

    if t_out <= t_window:
        return _detect_blocks(x2d, params)

    W = int(t_window)
    n_win = -(-t_out // W)
    T_need = n_win * W + K_HALO
    x2d = jnp.pad(x2d, ((0, 0), (0, T_need - T)))
    idx = jnp.arange(n_win)[:, None] * W + jnp.arange(W + K_HALO)[None, :]
    xw = x2d[:, idx].reshape(N * n_win, W + K_HALO)       # overlapping windows
    out_w = _detect_blocks(xw, params)                    # (N*n_win, W)
    return out_w.reshape(N, n_win * W)[:, :t_out]


def denoiser_detect_recording(recording, params, *, t_window=2048):
    """forward_recording: recording (T_rec, C) -> ff(recording.T[:, None, :]).T"""
    return denoiser_detect(recording.T[:, None, :], params,
                           t_window=t_window).T


# ------------------------- deterministic params -------------------------
def init_params(key):
    ks = jax.random.split(key, 6)
    s = 0.1
    w1 = s * jax.random.normal(ks[0], (F1, 1, K1), jnp.float32)
    b1 = s * jax.random.normal(ks[1], (F1,), jnp.float32)
    w2 = s * jax.random.normal(ks[2], (F2, F1, K2), jnp.float32)
    b2 = s * jax.random.normal(ks[3], (F2,), jnp.float32)
    out_w = s * jax.random.normal(ks[4], (SPIKE_SIZE, F2 * K3), jnp.float32)
    out_b = s * jax.random.normal(ks[5], (SPIKE_SIZE,), jnp.float32)
    # DenoiserDetect.__init__: slice rows [t0:t1) of the reshaped Linear weight.
    w3 = out_w.reshape(SPIKE_SIZE, F2, K3)[T0:T1_RANGE]    # (C_OUT, F2, K3)
    b3 = out_b[T0:T1_RANGE]                                # (C_OUT,)
    return w1, b1, w2, b2, w3, b3


def reference_forward(x, params):
    """Pure-JAX reference mirroring the PyTorch ff Sequential (full-f32 conv)."""
    w1, b1, w2, b2, w3, b3 = params
    dn = ('NCH', 'OIH', 'NCH')
    prec = lax.Precision.HIGHEST
    y = lax.conv_general_dilated(x, w1, (1,), 'VALID', dimension_numbers=dn,
                                 precision=prec)
    y = jnp.maximum(y + b1[None, :, None], 0.0)
    y = lax.conv_general_dilated(y, w2, (1,), 'VALID', dimension_numbers=dn,
                                 precision=prec)
    y = jnp.maximum(y + b2[None, :, None], 0.0)
    y = lax.conv_general_dilated(y, w3, (1,), 'VALID', dimension_numbers=dn,
                                 precision=prec)
    y = y + b3[None, :, None]
    return jnp.max(y, axis=1) - jnp.min(y, axis=1)         # PeakToPeak(dim=1)


if __name__ == "__main__":
    key = jax.random.PRNGKey(0)
    pkey, xkey, rkey = jax.random.split(key, 3)
    params = init_params(pkey)

    # --- batched waveform-snippet forward (DenoiserDetect.forward) ---
    N, T = 100, 64
    x = jax.random.normal(xkey, (N, 1, T), jnp.float32)     # NCW, C=1
    out = jax.block_until_ready(denoiser_detect(x, params))
    ref = jax.block_until_ready(reference_forward(x, params))
    assert out.shape == (N, T - K_HALO), out.shape
    np.testing.assert_allclose(np.asarray(out), np.asarray(ref),
                               rtol=5e-3, atol=5e-3)

    # --- streaming-recording forward (DenoiserDetect.forward_recording) ---
    T_rec, C = 700, 16
    rec = jax.random.normal(rkey, (T_rec, C), jnp.float32)
    ref_r = jax.block_until_ready(reference_forward(rec.T[:, None, :], params).T)
    out_r = jax.block_until_ready(denoiser_detect_recording(rec, params))
    assert out_r.shape == (T_rec - K_HALO, C), out_r.shape
    np.testing.assert_allclose(np.asarray(out_r), np.asarray(ref_r),
                               rtol=5e-3, atol=5e-3)

    # --- exercise the time-windowed (long-recording / large-T) path ---
    out_w = jax.block_until_ready(
        denoiser_detect_recording(rec, params, t_window=256))
    np.testing.assert_allclose(np.asarray(out_w), np.asarray(ref_r),
                               rtol=5e-3, atol=5e-3)

    print("KERNEL_OK")
</pallas_src>

<mosaic_0001>
module attributes {stable_mosaic.version = 11 : i64} {
  func.func @detect_kernel(%arg0: i32, %arg1: memref<1x1x3712xf32, #tpu.memory_space<vmem>>, %arg2: memref<16x5xf32, #tpu.memory_space<vmem>>, %arg3: memref<16x1xf32, #tpu.memory_space<vmem>>, %arg4: memref<8x112xbf16, #tpu.memory_space<vmem>>, %arg5: memref<8x1xf32, #tpu.memory_space<vmem>>, %arg6: memref<16x240xbf16, #tpu.memory_space<vmem>>, %arg7: memref<16x1xf32, #tpu.memory_space<vmem>>, %arg8: memref<1x1x3584xf32, #tpu.memory_space<vmem>>) attributes {dimension_semantics = [#tpu.dimension_semantics<parallel>], iteration_bounds = array<i64: 2>, scalar_prefetch = 0 : i64, scratch_operands = 0 : i64, tpu.core_type = #tpu.core_type<tc>, window_params = [{transform_indices = @transform_0, window_bounds = array<i64: 1, 1, 3712>}, {pipeline_mode = #tpu.pipeline_mode<synchronous>, transform_indices = @transform_1, window_bounds = array<i64: 16, 5>}, {pipeline_mode = #tpu.pipeline_mode<synchronous>, transform_indices = @transform_2, window_bounds = array<i64: 16, 1>}, {pipeline_mode = #tpu.pipeline_mode<synchronous>, transform_indices = @transform_3, window_bounds = array<i64: 8, 112>}, {pipeline_mode = #tpu.pipeline_mode<synchronous>, transform_indices = @transform_4, window_bounds = array<i64: 8, 1>}, {pipeline_mode = #tpu.pipeline_mode<synchronous>, transform_indices = @transform_5, window_bounds = array<i64: 16, 240>}, {pipeline_mode = #tpu.pipeline_mode<synchronous>, transform_indices = @transform_6, window_bounds = array<i64: 16, 1>}, {transform_indices = @transform_7, window_bounds = array<i64: 1, 1, 3584>}]} {
    %c0 = arith.constant 0 : index
    %c0_0 = arith.constant 0 : index
    %0 = vector.load %arg2[%c0, %c0_0] : memref<16x5xf32, #tpu.memory_space<vmem>>, vector<16x5xf32>
    %c0_1 = arith.constant 0 : index
    %c0_2 = arith.constant 0 : index
    %1 = vector.load %arg3[%c0_1, %c0_2] : memref<16x1xf32, #tpu.memory_space<vmem>>, vector<16x1xf32>
    %c0_3 = arith.constant 0 : index
    %c0_4 = arith.constant 0 : index
    %2 = vector.load %arg4[%c0_3, %c0_4] : memref<8x112xbf16, #tpu.memory_space<vmem>>, vector<8x112xbf16>
    %c0_5 = arith.constant 0 : index
    %c0_6 = arith.constant 0 : index
    %3 = vector.load %arg5[%c0_5, %c0_6] : memref<8x1xf32, #tpu.memory_space<vmem>>, vector<8x1xf32>
    %c0_7 = arith.constant 0 : index
    %c0_8 = arith.constant 0 : index
    %4 = vector.load %arg6[%c0_7, %c0_8] : memref<16x240xbf16, #tpu.memory_space<vmem>>, vector<16x240xbf16>
    %c0_9 = arith.constant 0 : index
    %c0_10 = arith.constant 0 : index
    %5 = vector.load %arg7[%c0_9, %c0_10] : memref<16x1xf32, #tpu.memory_space<vmem>>, vector<16x1xf32>
    %6 = vector.extract_strided_slice %4 {offsets = [0, 0], sizes = [16, 64], strides = [1, 1]} : vector<16x240xbf16> to vector<16x64xbf16>
    %7 = vector.extract_strided_slice %4 {offsets = [0, 64], sizes = [16, 64], strides = [1, 1]} : vector<16x240xbf16> to vector<16x64xbf16>
    %8 = vector.extract_strided_slice %4 {offsets = [0, 128], sizes = [16, 64], strides = [1, 1]} : vector<16x240xbf16> to vector<16x64xbf16>
    %9 = vector.extract_strided_slice %4 {offsets = [0, 192], sizes = [16, 48], strides = [1, 1]} : vector<16x240xbf16> to vector<16x48xbf16>
    %c0_i32 = arith.constant 0 : i32
    %c7_i32 = arith.constant 7 : i32
    %10 = arith.addi %c0_i32, %c7_i32 : i32
    %c1_i32 = arith.constant 1 : i32
    scf.for %arg9 = %c0_i32 to %10 step %c1_i32  : i32 {
      %c512_i32 = arith.constant 512 : i32
      %11 = arith.muli %arg9, %c512_i32 : i32
      %12 = tpu.assume_multiple %11, 128 : i32
      %c0_12 = arith.constant 0 : index
      %c0_13 = arith.constant 0 : index
      %13 = arith.index_cast %12 : i32 to index
      %14 = vector.load %arg1[%c0_12, %c0_13, %13] : memref<1x1x3712xf32, #tpu.memory_space<vmem>>, vector<1x1x551xf32>
      %15 = vector.shape_cast %14 : vector<1x1x551xf32> to vector<1x551xf32>
      %16 = vector.extract_strided_slice %0 {offsets = [0, 0], sizes = [16, 1], strides = [1, 1]} : vector<16x5xf32> to vector<16x1xf32>
      %17 = vector.extract_strided_slice %15 {offsets = [0, 0], sizes = [1, 547], strides = [1, 1]} : vector<1x551xf32> to vector<1x547xf32>
      %18 = vector.broadcast %16 : vector<16x1xf32> to vector<16x547xf32>
      %19 = vector.broadcast %17 : vector<1x547xf32> to vector<16x547xf32>
      %20 = arith.mulf %18, %19 : vector<16x547xf32>
      %21 = vector.extract_strided_slice %0 {offsets = [0, 1], sizes = [16, 1], strides = [1, 1]} : vector<16x5xf32> to vector<16x1xf32>
      %22 = vector.extract_strided_slice %15 {offsets = [0, 1], sizes = [1, 547], strides = [1, 1]} : vector<1x551xf32> to vector<1x547xf32>
      %23 = vector.broadcast %21 : vector<16x1xf32> to vector<16x547xf32>
      %24 = vector.broadcast %22 : vector<1x547xf32> to vector<16x547xf32>
      %25 = arith.mulf %23, %24 : vector<16x547xf32>
      %26 = arith.addf %20, %25 : vector<16x547xf32>
      %27 = vector.extract_strided_slice %0 {offsets = [0, 2], sizes = [16, 1], strides = [1, 1]} : vector<16x5xf32> to vector<16x1xf32>
      %28 = vector.extract_strided_slice %15 {offsets = [0, 2], sizes = [1, 547], strides = [1, 1]} : vector<1x551xf32> to vector<1x547xf32>
      %29 = vector.broadcast %27 : vector<16x1xf32> to vector<16x547xf32>
      %30 = vector.broadcast %28 : vector<1x547xf32> to vector<16x547xf32>
      %31 = arith.mulf %29, %30 : vector<16x547xf32>
      %32 = arith.addf %26, %31 : vector<16x547xf32>
      %33 = vector.extract_strided_slice %0 {offsets = [0, 3], sizes = [16, 1], strides = [1, 1]} : vector<16x5xf32> to vector<16x1xf32>
      %34 = vector.extract_strided_slice %15 {offsets = [0, 3], sizes = [1, 547], strides = [1, 1]} : vector<1x551xf32> to vector<1x547xf32>
      %35 = vector.broadcast %33 : vector<16x1xf32> to vector<16x547xf32>
      %36 = vector.broadcast %34 : vector<1x547xf32> to vector<16x547xf32>
      %37 = arith.mulf %35, %36 : vector<16x547xf32>
      %38 = arith.addf %32, %37 : vector<16x547xf32>
      %39 = vector.extract_strided_slice %0 {offsets = [0, 4], sizes = [16, 1], strides = [1, 1]} : vector<16x5xf32> to vector<16x1xf32>
      %40 = vector.extract_strided_slice %15 {offsets = [0, 4], sizes = [1, 547], strides = [1, 1]} : vector<1x551xf32> to vector<1x547xf32>
      %41 = vector.broadcast %39 : vector<16x1xf32> to vector<16x547xf32>
      %42 = vector.broadcast %40 : vector<1x547xf32> to vector<16x547xf32>
      %43 = arith.mulf %41, %42 : vector<16x547xf32>
      %44 = arith.addf %38, %43 : vector<16x547xf32>
      %45 = vector.broadcast %1 : vector<16x1xf32> to vector<16x547xf32>
      %46 = arith.addf %44, %45 : vector<16x547xf32>
      %cst = arith.constant 0.000000e+00 : f32
      %47 = vector.broadcast %cst : f32 to vector<16x547xf32>
      %48 = arith.maximumf %46, %47 : vector<16x547xf32>
      %49 = arith.truncf %48 : vector<16x547xf32> to vector<16x547xbf16>
      %50 = vector.extract_strided_slice %49 {offsets = [0, 0], sizes = [16, 541], strides = [1, 1]} : vector<16x547xbf16> to vector<16x541xbf16>
      %51 = vector.extract_strided_slice %49 {offsets = [0, 1], sizes = [16, 541], strides = [1, 1]} : vector<16x547xbf16> to vector<16x541xbf16>
      %52 = vector.extract_strided_slice %49 {offsets = [0, 2], sizes = [16, 541], strides = [1, 1]} : vector<16x547xbf16> to vector<16x541xbf16>
      %53 = vector.extract_strided_slice %49 {offsets = [0, 3], sizes = [16, 541], strides = [1, 1]} : vector<16x547xbf16> to vector<16x541xbf16>
      %54 = vector.extract_strided_slice %49 {offsets = [0, 4], sizes = [16, 541], strides = [1, 1]} : vector<16x547xbf16> to vector<16x541xbf16>
      %55 = vector.extract_strided_slice %49 {offsets = [0, 5], sizes = [16, 541], strides = [1, 1]} : vector<16x547xbf16> to vector<16x541xbf16>
      %56 = vector.extract_strided_slice %49 {offsets = [0, 6], sizes = [16, 541], strides = [1, 1]} : vector<16x547xbf16> to vector<16x541xbf16>
      %57 = tpu.concatenate %50, %51, %52, %53, %54, %55, %56 in 0 : vector<16x541xbf16>, vector<16x541xbf16>, vector<16x541xbf16>, vector<16x541xbf16>, vector<16x541xbf16>, vector<16x541xbf16>, vector<16x541xbf16> -> vector<112x541xbf16>
      %cst_14 = arith.constant dense<0.000000e+00> : vector<8x541xf32>
      %58 = tpu.matmul %2, %57, %cst_14 {dimension_numbers = #tpu.dot_dimension_numbers<[1], [0], [0], [1], [0, 0, 1, 1], [], []>} : vector<8x112xbf16>, vector<112x541xbf16>, vector<8x541xf32> -> vector<8x541xf32>
      %59 = vector.broadcast %3 : vector<8x1xf32> to vector<8x541xf32>
      %60 = arith.addf %58, %59 : vector<8x541xf32>
      %cst_15 = arith.constant 0.000000e+00 : f32
      %61 = vector.broadcast %cst_15 : f32 to vector<8x541xf32>
      %62 = arith.maximumf %60, %61 : vector<8x541xf32>
      %cst_16 = arith.constant 0.000000e+00 : f32
      %63 = vector.broadcast %cst_16 : f32 to vector<16x512xf32>
      %64 = vector.extract_strided_slice %62 {offsets = [0, 0], sizes = [8, 512], strides = [1, 1]} : vector<8x541xf32> to vector<8x512xf32>
      %65 = vector.extract_strided_slice %62 {offsets = [0, 1], sizes = [8, 512], strides = [1, 1]} : vector<8x541xf32> to vector<8x512xf32>
      %66 = vector.extract_strided_slice %62 {offsets = [0, 2], sizes = [8, 512], strides = [1, 1]} : vector<8x541xf32> to vector<8x512xf32>
      %67 = vector.extract_strided_slice %62 {offsets = [0, 3], sizes = [8, 512], strides = [1, 1]} : vector<8x541xf32> to vector<8x512xf32>
      %68 = vector.extract_strided_slice %62 {offsets = [0, 4], sizes = [8, 512], strides = [1, 1]} : vector<8x541xf32> to vector<8x512xf32>
      %69 = vector.extract_strided_slice %62 {offsets = [0, 5], sizes = [8, 512], strides = [1, 1]} : vector<8x541xf32> to vector<8x512xf32>
      %70 = vector.extract_strided_slice %62 {offsets = [0, 6], sizes = [8, 512], strides = [1, 1]} : vector<8x541xf32> to vector<8x512xf32>
      %71 = vector.extract_strided_slice %62 {offsets = [0, 7], sizes = [8, 512], strides = [1, 1]} : vector<8x541xf32> to vector<8x512xf32>
      %72 = tpu.concatenate %64, %65, %66, %67, %68, %69, %70, %71 in 0 : vector<8x512xf32>, vector<8x512xf32>, vector<8x512xf32>, vector<8x512xf32>, vector<8x512xf32>, vector<8x512xf32>, vector<8x512xf32>, vector<8x512xf32> -> vector<64x512xf32>
      %73 = arith.truncf %72 : vector<64x512xf32> to vector<64x512xbf16>
      %cst_17 = arith.constant dense<0.000000e+00> : vector<16x512xf32>
      %74 = tpu.matmul %6, %73, %cst_17 {dimension_numbers = #tpu.dot_dimension_numbers<[1], [0], [0], [1], [0, 0, 1, 1], [], []>} : vector<16x64xbf16>, vector<64x512xbf16>, vector<16x512xf32> -> vector<16x512xf32>
      %75 = arith.addf %63, %74 : vector<16x512xf32>
      %76 = vector.extract_strided_slice %62 {offsets = [0, 8], sizes = [8, 512], strides = [1, 1]} : vector<8x541xf32> to vector<8x512xf32>
      %77 = vector.extract_strided_slice %62 {offsets = [0, 9], sizes = [8, 512], strides = [1, 1]} : vector<8x541xf32> to vector<8x512xf32>
      %78 = vector.extract_strided_slice %62 {offsets = [0, 10], sizes = [8, 512], strides = [1, 1]} : vector<8x541xf32> to vector<8x512xf32>
      %79 = vector.extract_strided_slice %62 {offsets = [0, 11], sizes = [8, 512], strides = [1, 1]} : vector<8x541xf32> to vector<8x512xf32>
      %80 = vector.extract_strided_slice %62 {offsets = [0, 12], sizes = [8, 512], strides = [1, 1]} : vector<8x541xf32> to vector<8x512xf32>
      %81 = vector.extract_strided_slice %62 {offsets = [0, 13], sizes = [8, 512], strides = [1, 1]} : vector<8x541xf32> to vector<8x512xf32>
      %82 = vector.extract_strided_slice %62 {offsets = [0, 14], sizes = [8, 512], strides = [1, 1]} : vector<8x541xf32> to vector<8x512xf32>
      %83 = vector.extract_strided_slice %62 {offsets = [0, 15], sizes = [8, 512], strides = [1, 1]} : vector<8x541xf32> to vector<8x512xf32>
      %84 = tpu.concatenate %76, %77, %78, %79, %80, %81, %82, %83 in 0 : vector<8x512xf32>, vector<8x512xf32>, vector<8x512xf32>, vector<8x512xf32>, vector<8x512xf32>, vector<8x512xf32>, vector<8x512xf32>, vector<8x512xf32> -> vector<64x512xf32>
      %85 = arith.truncf %84 : vector<64x512xf32> to vector<64x512xbf16>
      %cst_18 = arith.constant dense<0.000000e+00> : vector<16x512xf32>
      %86 = tpu.matmul %7, %85, %cst_18 {dimension_numbers = #tpu.dot_dimension_numbers<[1], [0], [0], [1], [0, 0, 1, 1], [], []>} : vector<16x64xbf16>, vector<64x512xbf16>, vector<16x512xf32> -> vector<16x512xf32>
      %87 = arith.addf %75, %86 : vector<16x512xf32>
      %88 = vector.extract_strided_slice %62 {offsets = [0, 16], sizes = [8, 512], strides = [1, 1]} : vector<8x541xf32> to vector<8x512xf32>
      %89 = vector.extract_strided_slice %62 {offsets = [0, 17], sizes = [8, 512], strides = [1, 1]} : vector<8x541xf32> to vector<8x512xf32>
      %90 = vector.extract_strided_slice %62 {offsets = [0, 18], sizes = [8, 512], strides = [1, 1]} : vector<8x541xf32> to vector<8x512xf32>
      %91 = vector.extract_strided_slice %62 {offsets = [0, 19], sizes = [8, 512], strides = [1, 1]} : vector<8x541xf32> to vector<8x512xf32>
      %92 = vector.extract_strided_slice %62 {offsets = [0, 20], sizes = [8, 512], strides = [1, 1]} : vector<8x541xf32> to vector<8x512xf32>
      %93 = vector.extract_strided_slice %62 {offsets = [0, 21], sizes = [8, 512], strides = [1, 1]} : vector<8x541xf32> to vector<8x512xf32>
      %94 = vector.extract_strided_slice %62 {offsets = [0, 22], sizes = [8, 512], strides = [1, 1]} : vector<8x541xf32> to vector<8x512xf32>
      %95 = vector.extract_strided_slice %62 {offsets = [0, 23], sizes = [8, 512], strides = [1, 1]} : vector<8x541xf32> to vector<8x512xf32>
      %96 = tpu.concatenate %88, %89, %90, %91, %92, %93, %94, %95 in 0 : vector<8x512xf32>, vector<8x512xf32>, vector<8x512xf32>, vector<8x512xf32>, vector<8x512xf32>, vector<8x512xf32>, vector<8x512xf32>, vector<8x512xf32> -> vector<64x512xf32>
      %97 = arith.truncf %96 : vector<64x512xf32> to vector<64x512xbf16>
      %cst_19 = arith.constant dense<0.000000e+00> : vector<16x512xf32>
      %98 = tpu.matmul %8, %97, %cst_19 {dimension_numbers = #tpu.dot_dimension_numbers<[1], [0], [0], [1], [0, 0, 1, 1], [], []>} : vector<16x64xbf16>, vector<64x512xbf16>, vector<16x512xf32> -> vector<16x512xf32>
      %99 = arith.addf %87, %98 : vector<16x512xf32>
      %100 = vector.extract_strided_slice %62 {offsets = [0, 24], sizes = [8, 512], strides = [1, 1]} : vector<8x541xf32> to vector<8x512xf32>
      %101 = vector.extract_strided_slice %62 {offsets = [0, 25], sizes = [8, 512], strides = [1, 1]} : vector<8x541xf32> to vector<8x512xf32>
      %102 = vector.extract_strided_slice %62 {offsets = [0, 26], sizes = [8, 512], strides = [1, 1]} : vector<8x541xf32> to vector<8x512xf32>
      %103 = vector.extract_strided_slice %62 {offsets = [0, 27], sizes = [8, 512], strides = [1, 1]} : vector<8x541xf32> to vector<8x512xf32>
      %104 = vector.extract_strided_slice %62 {offsets = [0, 28], sizes = [8, 512], strides = [1, 1]} : vector<8x541xf32> to vector<8x512xf32>
      %105 = vector.extract_strided_slice %62 {offsets = [0, 29], sizes = [8, 512], strides = [1, 1]} : vector<8x541xf32> to vector<8x512xf32>
      %106 = tpu.concatenate %100, %101, %102, %103, %104, %105 in 0 : vector<8x512xf32>, vector<8x512xf32>, vector<8x512xf32>, vector<8x512xf32>, vector<8x512xf32>, vector<8x512xf32> -> vector<48x512xf32>
      %107 = arith.truncf %106 : vector<48x512xf32> to vector<48x512xbf16>
      %cst_20 = arith.constant dense<0.000000e+00> : vector<16x512xf32>
      %108 = tpu.matmul %9, %107, %cst_20 {dimension_numbers = #tpu.dot_dimension_numbers<[1], [0], [0], [1], [0, 0, 1, 1], [], []>} : vector<16x48xbf16>, vector<48x512xbf16>, vector<16x512xf32> -> vector<16x512xf32>
      %109 = arith.addf %99, %108 : vector<16x512xf32>
      %110 = vector.broadcast %5 : vector<16x1xf32> to vector<16x512xf32>
      %111 = arith.addf %109, %110 : vector<16x512xf32>
      %cst_21 = arith.constant dense<0xFF800000> : vector<512xf32>
      %112 = vector.multi_reduction <maximumf>, %111, %cst_21 [0] : vector<16x512xf32> to vector<512xf32>
      %113 = vector.shape_cast %112 : vector<512xf32> to vector<1x512xf32>
      %cst_22 = arith.constant dense<0x7F800000> : vector<512xf32>
      %114 = vector.multi_reduction <minimumf>, %111, %cst_22 [0] : vector<16x512xf32> to vector<512xf32>
      %115 = vector.shape_cast %114 : vector<512xf32> to vector<1x512xf32>
      %116 = arith.subf %113, %115 : vector<1x512xf32>
      %c0_23 = arith.constant 0 : index
      %c0_24 = arith.constant 0 : index
      %117 = arith.index_cast %12 : i32 to index
      %118 = vector.load %arg8[%c0_23, %c0_24, %117] : memref<1x1x3584xf32, #tpu.memory_space<vmem>>, vector<1x1x512xf32>
      %119 = vector.shape_cast %118 : vector<1x1x512xf32> to vector<1x512xf32>
      %120 = vector.shape_cast %116 : vector<1x512xf32> to vector<1x1x512xf32>
      tpu.vector_store %arg8[%c0_23, %c0_24, %117], %120 {strides = array<i32>} : memref<1x1x3584xf32, #tpu.memory_space<vmem>>, vector<1x1x512xf32>,
    }
    %c7_i32_11 = arith.constant 7 : i32
    return
  }
  func.func @transform_0(%arg0: i32) -> (i32, i32, i32) {
    %c0_i32 = arith.constant 0 : i32
    %c0_i32_0 = arith.constant 0 : i32
    %c0_i32_1 = arith.constant 0 : i32
    return %arg0, %c0_i32, %c0_i32_0 : i32, i32, i32
  }
  func.func @transform_1(%arg0: i32) -> (i32, i32) {
    %c0_i32 = arith.constant 0 : i32
    %c0_i32_0 = arith.constant 0 : i32
    %c0_i32_1 = arith.constant 0 : i32
    return %c0_i32, %c0_i32_0 : i32, i32
  }
  func.func @transform_2(%arg0: i32) -> (i32, i32) {
    %c0_i32 = arith.constant 0 : i32
    %c0_i32_0 = arith.constant 0 : i32
    %c0_i32_1 = arith.constant 0 : i32
    return %c0_i32, %c0_i32_0 : i32, i32
  }
  func.func @transform_3(%arg0: i32) -> (i32, i32) {
    %c0_i32 = arith.constant 0 : i32
    %c0_i32_0 = arith.constant 0 : i32
    %c0_i32_1 = arith.constant 0 : i32
    return %c0_i32, %c0_i32_0 : i32, i32
  }
  func.func @transform_4(%arg0: i32) -> (i32, i32) {
    %c0_i32 = arith.constant 0 : i32
    %c0_i32_0 = arith.constant 0 : i32
    %c0_i32_1 = arith.constant 0 : i32
    return %c0_i32, %c0_i32_0 : i32, i32
  }
  func.func @transform_5(%arg0: i32) -> (i32, i32) {
    %c0_i32 = arith.constant 0 : i32
    %c0_i32_0 = arith.constant 0 : i32
    %c0_i32_1 = arith.constant 0 : i32
    return %c0_i32, %c0_i32_0 : i32, i32
  }
  func.func @transform_6(%arg0: i32) -> (i32, i32) {
    %c0_i32 = arith.constant 0 : i32
    %c0_i32_0 = arith.constant 0 : i32
    %c0_i32_1 = arith.constant 0 : i32
    return %c0_i32, %c0_i32_0 : i32, i32
  }
  func.func @transform_7(%arg0: i32) -> (i32, i32, i32) {
    %c0_i32 = arith.constant 0 : i32
    %c0_i32_0 = arith.constant 0 : i32
    %c0_i32_1 = arith.constant 0 : i32
    return %arg0, %c0_i32, %c0_i32_0 : i32, i32, i32
  }
}

</mosaic_0001>

<llo_original>
// kernel: tpu_custom_call.1
$region0: #{tpu_custom_call.1}
  #allocation0 [shape = 'u32[]', space=smem, size = 0x4, offset = 0x4, fixed_abs, tag = 'smem constant byte address 0x4 - core index']
  #allocation1 [shape = 'u32[144,128]{1,0:T(1,128)}', space=vmem, size = 0x12000, scoped, tag = 'internal scratch']
  %s0 = inlined_call_operand.vmem [shape: f32[2,1,3712], index: 0, kind: input, shape index: {}]
  %s1 = inlined_call_operand.vmem [shape: f32[16,5], index: 1, kind: input, shape index: {}]
  %s2 = inlined_call_operand.vmem [shape: f32[16,1], index: 2, kind: input, shape index: {}]
  %s3 = inlined_call_operand.vmem [shape: bf16[8,112], index: 3, kind: input, shape index: {}]
  %s4 = inlined_call_operand.vmem [shape: f32[8,1], index: 4, kind: input, shape index: {}]
  %s5 = inlined_call_operand.vmem [shape: bf16[16,240], index: 5, kind: input, shape index: {}]
  %s6 = inlined_call_operand.vmem [shape: f32[16,1], index: 6, kind: input, shape index: {}]
  %s7 = inlined_call_operand.hbm [shape: f32[2,1,3584], index: 7, kind: output, shape index: {}]
  %s8 = sld [smem:[#allocation0]]
  $region68: #{tpu_custom_call.1} parent=0
    _
  %s10 = ssub.s32 1, %s8
  %s11 = scalar_select 0, %s10, %s8
  $region1: #{tpu_custom_call.1} parent=0
    #allocation2 [shape = 'u8[28672]{0}', space=vmem, size = 0x7000, scoped, tag = 'output window, operand 0']
    #allocation3 [shape = 's32[2]{0}', space=sflag, size = 0x8, scoped, tag = 'scoped memory for tpu_custom_call.1']
    %12 = vsyncpa [#allocation3], 0
    %s13 = scalar_lea.sflag [#allocation3], 1
    %14 = vsyncpa %s13, 0
    loop: start=0, step=1, limit=4
    $region2: #{tpu_custom_call.1} parent=1 // loop_pre_header
      _
    $region3: #{tpu_custom_call.1} parent=1 // loop_header
      %s16 = sphi 0, %s20
      %p17 = scmp.ge.s32.totalorder %s16, 4
      %s26 = sphi 0, %s28
      %s29 = sphi 0, %s26
      %s30 = sphi 0, %s29
      %s46 = sphi 0, %s30
      %s50 = sphi 0, %s50
      %s52 = sphi 0, %s50
      %s53 = sphi 0, %s52
      %s67 = sphi 0, %s53
      %s71 = sphi 0, %s71
      %s73 = sphi 0, %s71
      %s74 = sphi 0, %s73
      %s88 = sphi 0, %s74
      %s92 = sphi 0, %s92
      %s94 = sphi 0, %s92
      %s95 = sphi 0, %s94
      %s109 = sphi 0, %s95
      %s113 = sphi 0, %s113
      %s115 = sphi 0, %s113
      %s116 = sphi 0, %s115
      %s130 = sphi 0, %s116
      %s134 = sphi 0, %s134
      %s136 = sphi 0, %s134
      %s137 = sphi 0, %s136
      %s151 = sphi 0, %s137
      %s155 = sphi 0, %s155
      %s157 = sphi 0, %s155
      %s158 = sphi 0, %s157
      %s172 = sphi 0, %s158
      %s178 = sphi 0, %s180
      %s181 = sphi 0, %s178
      %s182 = sphi 0, %s181
      %s198 = sphi 0, %s182
    $region4: #{tpu_custom_call.1} parent=1 // loop_header_branch
      %19 = sbr.rel (%p17) target = $region8
    $region5: #{tpu_custom_call.1} parent=1 // loop_body
      %s21 = ssub.s32 %s16, 1
      %s22 = ssub.s32 %s16, 2
      %s23 = sadd.s32 %s16, 1
      %s24 = ssub.s32 %s16, %s23
      %p25 = scmp.eq.s32.totalorder %s24, 0
      %s27 = sadd.s32 %s26, 1
      %s28 = scalar_select %p25, %s26, %s27
      %p31 = pneg %p25
      %p32 = scmp.eq.s32.totalorder %s16, 1
      %p33 = por %p31, %p32
      %p34 = scmp.ne.s32.totalorder %s26, %s29
      %p35 = scmp.eq.s32.totalorder %s16, 0
      %p36 = por %p34, %p35
      %p37 = scmp.ne.s32.totalorder %s26, %s29
      %p38 = scmp.eq.s32.totalorder %s21, 1
      %p39 = por %p37, %p38
      %p40 = scmp.ne.s32.totalorder %s29, %s30
      %p41 = scmp.eq.s32.totalorder %s21, 0
      %p42 = por %p40, %p41
      %p43 = scmp.ne.s32.totalorder %s29, %s30
      %p44 = scmp.eq.s32.totalorder %s22, 1
      %p45 = por %p43, %p44
      %p47 = scmp.ne.s32.totalorder %s30, %s46
      %p48 = scmp.eq.s32.totalorder %s22, 0
      %p49 = por %p47, %p48
      %s51 = sadd.s32 %s50, 1
      %p54 = scmp.eq.s32.totalorder %s16, 1
      %p55 = scmp.ne.s32.totalorder %s50, %s52
      %p56 = scmp.eq.s32.totalorder %s16, 0
      %p57 = por %p55, %p56
      %p58 = scmp.ne.s32.totalorder %s50, %s52
      %p59 = scmp.eq.s32.totalorder %s21, 1
      %p60 = por %p58, %p59
      %p61 = scmp.ne.s32.totalorder %s52, %s53
      %p62 = scmp.eq.s32.totalorder %s21, 0
      %p63 = por %p61, %p62
      %p64 = scmp.ne.s32.totalorder %s52, %s53
      %p65 = scmp.eq.s32.totalorder %s22, 1
      %p66 = por %p64, %p65
      %p68 = scmp.ne.s32.totalorder %s53, %s67
      %p69 = scmp.eq.s32.totalorder %s22, 0
      %p70 = por %p68, %p69
      %s72 = sadd.s32 %s71, 1
      %p75 = scmp.eq.s32.totalorder %s16, 1
      %p76 = scmp.ne.s32.totalorder %s71, %s73
      %p77 = scmp.eq.s32.totalorder %s16, 0
      %p78 = por %p76, %p77
      %p79 = scmp.ne.s32.totalorder %s71, %s73
      %p80 = scmp.eq.s32.totalorder %s21, 1
      %p81 = por %p79, %p80
      %p82 = scmp.ne.s32.totalorder %s73, %s74
      %p83 = scmp.eq.s32.totalorder %s21, 0
      %p84 = por %p82, %p83
      %p85 = scmp.ne.s32.totalorder %s73, %s74
      %p86 = scmp.eq.s32.totalorder %s22, 1
      %p87 = por %p85, %p86
      %p89 = scmp.ne.s32.totalorder %s74, %s88
      %p90 = scmp.eq.s32.totalorder %s22, 0
      %p91 = por %p89, %p90
      %s93 = sadd.s32 %s92, 1
      %p96 = scmp.eq.s32.totalorder %s16, 1
      %p97 = scmp.ne.s32.totalorder %s92, %s94
      %p98 = scmp.eq.s32.totalorder %s16, 0
      %p99 = por %p97, %p98
      %p100 = scmp.ne.s32.totalorder %s92, %s94
      %p101 = scmp.eq.s32.totalorder %s21, 1
      %p102 = por %p100, %p101
      %p103 = scmp.ne.s32.totalorder %s94, %s95
      %p104 = scmp.eq.s32.totalorder %s21, 0
      %p105 = por %p103, %p104
      %p106 = scmp.ne.s32.totalorder %s94, %s95
      %p107 = scmp.eq.s32.totalorder %s22, 1
      %p108 = por %p106, %p107
      %p110 = scmp.ne.s32.totalorder %s95, %s109
      %p111 = scmp.eq.s32.totalorder %s22, 0
      %p112 = por %p110, %p111
      %s114 = sadd.s32 %s113, 1
      %p117 = scmp.eq.s32.totalorder %s16, 1
      %p118 = scmp.ne.s32.totalorder %s113, %s115
      %p119 = scmp.eq.s32.totalorder %s16, 0
      %p120 = por %p118, %p119
      %p121 = scmp.ne.s32.totalorder %s113, %s115
      %p122 = scmp.eq.s32.totalorder %s21, 1
      %p123 = por %p121, %p122
      %p124 = scmp.ne.s32.totalorder %s115, %s116
      %p125 = scmp.eq.s32.totalorder %s21, 0
      %p126 = por %p124, %p125
      %p127 = scmp.ne.s32.totalorder %s115, %s116
      %p128 = scmp.eq.s32.totalorder %s22, 1
      %p129 = por %p127, %p128
      %p131 = scmp.ne.s32.totalorder %s116, %s130
      %p132 = scmp.eq.s32.totalorder %s22, 0
      %p133 = por %p131, %p132
      %s135 = sadd.s32 %s134, 1
      %p138 = scmp.eq.s32.totalorder %s16, 1
      %p139 = scmp.ne.s32.totalorder %s134, %s136
      %p140 = scmp.eq.s32.totalorder %s16, 0
      %p141 = por %p139, %p140
      %p142 = scmp.ne.s32.totalorder %s134, %s136
      %p143 = scmp.eq.s32.totalorder %s21, 1
      %p144 = por %p142, %p143
      %p145 = scmp.ne.s32.totalorder %s136, %s137
      %p146 = scmp.eq.s32.totalorder %s21, 0
      %p147 = por %p145, %p146
      %p148 = scmp.ne.s32.totalorder %s136, %s137
      %p149 = scmp.eq.s32.totalorder %s22, 1
      %p150 = por %p148, %p149
      %p152 = scmp.ne.s32.totalorder %s137, %s151
      %p153 = scmp.eq.s32.totalorder %s22, 0
      %p154 = por %p152, %p153
      %s156 = sadd.s32 %s155, 1
      %p159 = scmp.eq.s32.totalorder %s16, 1
      %p160 = scmp.ne.s32.totalorder %s155, %s157
      %p161 = scmp.eq.s32.totalorder %s16, 0
      %p162 = por %p160, %p161
      %p163 = scmp.ne.s32.totalorder %s155, %s157
      %p164 = scmp.eq.s32.totalorder %s21, 1
      %p165 = por %p163, %p164
      %p166 = scmp.ne.s32.totalorder %s157, %s158
      %p167 = scmp.eq.s32.totalorder %s21, 0
      %p168 = por %p166, %p167
      %p169 = scmp.ne.s32.totalorder %s157, %s158
      %p170 = scmp.eq.s32.totalorder %s22, 1
      %p171 = por %p169, %p170
      %p173 = scmp.ne.s32.totalorder %s158, %s172
      %p174 = scmp.eq.s32.totalorder %s22, 0
      %p175 = por %p173, %p174
      %s176 = ssub.s32 %s16, %s23
      %p177 = scmp.eq.s32.totalorder %s176, 0
      %s179 = sadd.s32 %s178, 1
      %s180 = scalar_select %p177, %s178, %s179
      %p183 = pneg %p177
      %p184 = scmp.eq.s32.totalorder %s16, 1
      %p185 = por %p183, %p184
      %p186 = scmp.ne.s32.totalorder %s178, %s181
      %p187 = scmp.eq.s32.totalorder %s16, 0
      %p188 = por %p186, %p187
      %p189 = scmp.ne.s32.totalorder %s178, %s181
      %p190 = scmp.eq.s32.totalorder %s21, 1
      %p191 = por %p189, %p190
      %p192 = scmp.ne.s32.totalorder %s181, %s182
      %p193 = scmp.eq.s32.totalorder %s21, 0
      %p194 = por %p192, %p193
      %p195 = scmp.ne.s32.totalorder %s181, %s182
      %p196 = scmp.eq.s32.totalorder %s22, 1
      %p197 = por %p195, %p196
      %p199 = scmp.ne.s32.totalorder %s182, %s198
      %p200 = scmp.eq.s32.totalorder %s22, 0
      %p201 = por %p199, %p200
      %p202 = scmp.le.s32.totalorder 1, %s16
      %p203 = scmp.lt.s32.totalorder %s16, 3
      %p204 = pnand %p202, %p203
      %p205 = pneg %p204
      // Predicated region
      $region9: #{tpu_custom_call.1} parent=5 // pred_check
        _
      $region10: #{tpu_custom_call.1} parent=5 // pred_check_branch
        %207 = sbr.rel (%p204) target = $region12
      $region11: #{tpu_custom_call.1} parent=5 // pred_region
        %s208 = ssub.s32 %s16, 1
        // Predicated region
        $region13: #{tpu_custom_call.1} parent=11 // pred_check
          %p209 = pneg %p63
        $region14: #{tpu_custom_call.1} parent=11 // pred_check_branch
          %211 = sbr.rel (%p209) target = $region16
        $region15: #{tpu_custom_call.1} parent=11 // pred_region
          _
        $region16: #{tpu_custom_call.1} parent=11 // pred_fallthru
          _
        // Predicated region
        $region17: #{tpu_custom_call.1} parent=11 // pred_check
          %p212 = pneg %p84
        $region18: #{tpu_custom_call.1} parent=11 // pred_check_branch
          %214 = sbr.rel (%p212) target = $region20
        $region19: #{tpu_custom_call.1} parent=11 // pred_region
          _
        $region20: #{tpu_custom_call.1} parent=11 // pred_fallthru
          _
        // Predicated region
        $region21: #{tpu_custom_call.1} parent=11 // pred_check
          %p215 = pneg %p105
        $region22: #{tpu_custom_call.1} parent=11 // pred_check_branch
          %217 = sbr.rel (%p215) target = $region24
        $region23: #{tpu_custom_call.1} parent=11 // pred_region
          _
        $region24: #{tpu_custom_call.1} parent=11 // pred_fallthru
          _
        // Predicated region
        $region25: #{tpu_custom_call.1} parent=11 // pred_check
          %p218 = pneg %p126
        $region26: #{tpu_custom_call.1} parent=11 // pred_check_branch
          %220 = sbr.rel (%p218) target = $region28
        $region27: #{tpu_custom_call.1} parent=11 // pred_region
          _
        $region28: #{tpu_custom_call.1} parent=11 // pred_fallthru
          _
        // Predicated region
        $region29: #{tpu_custom_call.1} parent=11 // pred_check
          %p221 = pneg %p147
        $region30: #{tpu_custom_call.1} parent=11 // pred_check_branch
          %223 = sbr.rel (%p221) target = $region32
        $region31: #{tpu_custom_call.1} parent=11 // pred_region
          _
        $region32: #{tpu_custom_call.1} parent=11 // pred_fallthru
          _
        // Predicated region
        $region33: #{tpu_custom_call.1} parent=11 // pred_check
          %p224 = pneg %p168
        $region34: #{tpu_custom_call.1} parent=11 // pred_check_branch
          %226 = sbr.rel (%p224) target = $region36
        $region35: #{tpu_custom_call.1} parent=11 // pred_region
          _
        $region36: #{tpu_custom_call.1} parent=11 // pred_fallthru
          _
      $region12: #{tpu_custom_call.1} parent=5 // pred_fallthru
        _
      %p227 = scmp.lt.s32.totalorder %s16, 2
      // Predicated region
      $region37: #{tpu_custom_call.1} parent=5 // pred_check
        %p228 = pneg %p227
      $region38: #{tpu_custom_call.1} parent=5 // pred_check_branch
        %230 = sbr.rel (%p228) target = $region40
      $region39: #{tpu_custom_call.1} parent=5 // pred_region
        // Predicated region
        $region41: #{tpu_custom_call.1} parent=39 // pred_check
          %p231 = pneg %p36
        $region42: #{tpu_custom_call.1} parent=39 // pred_check_branch
          %233 = sbr.rel (%p231) target = $region44
        $region43: #{tpu_custom_call.1} parent=39 // pred_region
          %p234 = scmp.lt.s32.totalorder %s16, 1
          %s235 = scalar_select %p234, %s16, 1
          %s236 = smul.addr %s235, 29
          %s237 = scalar_lea.vmem %s0, %s236
        $region44: #{tpu_custom_call.1} parent=39 // pred_fallthru
          _
      $region40: #{tpu_custom_call.1} parent=5 // pred_fallthru
        _
      %p238 = scmp.le.s32.totalorder 1, %s16
      %p239 = scmp.lt.s32.totalorder %s16, 3
      %p240 = pnand %p238, %p239
      %p241 = pneg %p240
      // Predicated region
      $region45: #{tpu_custom_call.1} parent=5 // pred_check
        _
      $region46: #{tpu_custom_call.1} parent=5 // pred_check_branch
        %243 = sbr.rel (%p240) target = $region48
      $region47: #{tpu_custom_call.1} parent=5 // pred_region
        %s244 = ssub.s32 %s16, 1
        %p245 = scmp.lt.s32.totalorder %s21, 1
        %s246 = scalar_select %p245, %s21, 1
        %s247 = smul.addr %s246, 29
        %s248 = scalar_lea.vmem %s0, %s247
        %p249 = pneg %p42
        %p250 = pneg %p39
        %p251 = pneg %p63
        %p252 = pneg %p60
        %p253 = pneg %p84
        %p254 = pneg %p81
        %p255 = pneg %p105
        %p256 = pneg %p102
        %p257 = pneg %p126
        %p258 = pneg %p123
        %p259 = pneg %p147
        %p260 = pneg %p144
        %p261 = pneg %p168
        %p262 = pneg %p165
        %p263 = pneg %p194
        %p264 = pneg %p191
        %s265 = sand.u32 %s181, 1
        %s266 = scalar_lea.sflag [#allocation3], %s265
        %s267 = sand.u32 %s181, 1
        %s268 = smul.addr %s267, 28
        %s269 = scalar_lea.vmem [#allocation2], %s268
        %p270 = scmp.lt.s32.totalorder %s21, 1
        %s271 = scalar_select %p270, %s21, 1
        %s272 = smul.addr %s271, 29
        %s273 = scalar_lea.vmem %s0, %s272
        %v275 = vld [vmem:[%s1] sm:$0xff]
        %v276 = vld [vmem:[%s1 + $0x8] sm:$0xff]
        %v277 = vld [vmem:[%s2] sm:$0xff]
        %v278 = vld [vmem:[%s2 + $0x8] sm:$0xff]
        %v279 = vld [vmem:[%s3] sm:$0xf]
        %v280 = vld [vmem:[%s4] sm:$0xff]
        %v281 = vld [vmem:[%s5] sm:$0xff]
        %v282 = vld [vmem:[%s5 + $0x8] sm:$0xff]
        %v283 = vld [vmem:[%s6] sm:$0xff]
        %v284 = vld [vmem:[%s6 + $0x8] sm:$0xff]
        loop: start=0, step=1, limit=7
        $region49: #{tpu_custom_call.1} parent=47 // loop_pre_header
          _
        $region50: #{tpu_custom_call.1} parent=47 // loop_header
          %s286 = sphi 0, %s290
          %p287 = scmp.ge.s32.totalorder %s286, 7
        $region51: #{tpu_custom_call.1} parent=47 // loop_header_branch
          %289 = sbr.rel (%p287) target = $region55
        $region52: #{tpu_custom_call.1} parent=47 // loop_body
          %s291 = smul.u32 %s286, 512
          %s292 = sshra.s32 %s291, 7
          %s293 = sand.u32 %s291, 127
          %s294 = scalar_lea.vmem %s273, %s292
          %v295 = vld [vmem:[%s294] sm:$0x1f]
          %297 = vset.pattern.permute.xlu0 0
          %298 = vperm.xlu0 %297, %v275
          %v299 = vpop.permute.xlu0 %298
          %302 = vset.pattern.permute.xlu0 0
          %303 = vperm.xlu0 %302, %v276
          %v304 = vpop.permute.xlu0 %303
          %v307 = vlaneseq
          %v308 = vshrl.u32 %v307, 7
          %v309 = vsub.s32 0, %v308
          %v310 = vrot.slane %v295, %v309
          %v311 = vlaneseq
          %v312 = vshrl.u32 %v311, 7
          %v313 = vsub.s32 1, %v312
          %v314 = vrot.slane %v295, %v313
          %v315 = vlaneseq
          %v316 = vshrl.u32 %v315, 7
          %v317 = vsub.s32 2, %v316
          %v318 = vrot.slane %v295, %v317
          %v319 = vlaneseq
          %v320 = vshrl.u32 %v319, 7
          %v321 = vsub.s32 3, %v320
          %v322 = vrot.slane %v295, %v321
          %v323 = vlaneseq
          %v324 = vshrl.u32 %v323, 7
          %v325 = vsub.s32 4, %v324
          %v326 = vrot.slane %v295, %v325
          %v332 = vmul.f32 %v299, %v310
          %v333 = vmul.f32 %v299, %v314
          %v334 = vmul.f32 %v299, %v318
          %v335 = vmul.f32 %v299, %v322
          %v336 = vmul.f32 %v299, %v326
          %v337 = vmul.f32 %v304, %v310
          %v338 = vmul.f32 %v304, %v314
          %v339 = vmul.f32 %v304, %v318
          %v340 = vmul.f32 %v304, %v322
          %v341 = vmul.f32 %v304, %v326
          %342 = vset.pattern.permute.xlu0 1
          %343 = vperm.xlu0 %342, %v275
          %v344 = vpop.permute.xlu0 %343
          %346 = vset.pattern.permute.xlu0 1
          %347 = vperm.xlu0 %346, %v276
          %v348 = vpop.permute.xlu0 %347
          %v350 = vmul.f32 %v344, %v310
          %v351 = vmul.f32 %v344, %v314
          %v352 = vmul.f32 %v344, %v318
          %v353 = vmul.f32 %v344, %v322
          %v354 = vmul.f32 %v344, %v326
          %v355 = vmul.f32 %v348, %v310
          %v356 = vmul.f32 %v348, %v314
          %v357 = vmul.f32 %v348, %v318
          %v358 = vmul.f32 %v348, %v322
          %v359 = vmul.f32 %v348, %v326
          %370 = vrot.lane.b32.xlu0 %v350, 127
          %v371 = vpop.permute.xlu0 %370
          %372 = vrot.lane.b32.xlu0 %v351, 127
          %v373 = vpop.permute.xlu0 %372
          %374 = vrot.lane.b32.xlu0 %v352, 127
          %v375 = vpop.permute.xlu0 %374
          %376 = vrot.lane.b32.xlu0 %v353, 127
          %v377 = vpop.permute.xlu0 %376
          %378 = vrot.lane.b32.xlu0 %v354, 127
          %v379 = vpop.permute.xlu0 %378
          %380 = vrot.lane.b32.xlu0 %v355, 127
          %v381 = vpop.permute.xlu0 %380
          %382 = vrot.lane.b32.xlu0 %v356, 127
          %v383 = vpop.permute.xlu0 %382
          %384 = vrot.lane.b32.xlu0 %v357, 127
          %v385 = vpop.permute.xlu0 %384
          %386 = vrot.lane.b32.xlu0 %v358, 127
          %v387 = vpop.permute.xlu0 %386
          %388 = vrot.lane.b32.xlu0 %v359, 127
          %v389 = vpop.permute.xlu0 %388
          %vm390 = vcmask 1039360
          %v391 = vsel %vm390, %v371, %v373
          %v392 = vsel %vm390, %v373, %v375
          %v393 = vsel %vm390, %v375, %v377
          %v394 = vsel %vm390, %v377, %v379
          %v395 = vsel %vm390, %v381, %v383
          %v396 = vsel %vm390, %v383, %v385
          %v397 = vsel %vm390, %v385, %v387
          %v398 = vsel %vm390, %v387, %v389
          %v409 = vadd.f32 %v332, %v391
          %v410 = vadd.f32 %v333, %v392
          %v411 = vadd.f32 %v334, %v393
          %v412 = vadd.f32 %v335, %v394
          %v413 = vadd.f32 %v336, %v379
          %v414 = vadd.f32 %v337, %v395
          %v415 = vadd.f32 %v338, %v396
          %v416 = vadd.f32 %v339, %v397
          %v417 = vadd.f32 %v340, %v398
          %v418 = vadd.f32 %v341, %v389
          %419 = vset.pattern.permute.xlu0 2
          %420 = vperm.xlu0 %419, %v275
          %v421 = vpop.permute.xlu0 %420
          %423 = vset.pattern.permute.xlu0 2
          %424 = vperm.xlu0 %423, %v276
          %v425 = vpop.permute.xlu0 %424
          %v427 = vmul.f32 %v421, %v310
          %v428 = vmul.f32 %v421, %v314
          %v429 = vmul.f32 %v421, %v318
          %v430 = vmul.f32 %v421, %v322
          %v431 = vmul.f32 %v421, %v326
          %v432 = vmul.f32 %v425, %v310
          %v433 = vmul.f32 %v425, %v314
          %v434 = vmul.f32 %v425, %v318
          %v435 = vmul.f32 %v425, %v322
          %v436 = vmul.f32 %v425, %v326
          %447 = vrot.lane.b32.xlu0 %v427, 126
          %v448 = vpop.permute.xlu0 %447
          %449 = vrot.lane.b32.xlu0 %v428, 126
          %v450 = vpop.permute.xlu0 %449
          %451 = vrot.lane.b32.xlu0 %v429, 126
          %v452 = vpop.permute.xlu0 %451
          %453 = vrot.lane.b32.xlu0 %v430, 126
          %v454 = vpop.permute.xlu0 %453
          %455 = vrot.lane.b32.xlu0 %v431, 126
          %v456 = vpop.permute.xlu0 %455
          %457 = vrot.lane.b32.xlu0 %v432, 126
          %v458 = vpop.permute.xlu0 %457
          %459 = vrot.lane.b32.xlu0 %v433, 126
          %v460 = vpop.permute.xlu0 %459
          %461 = vrot.lane.b32.xlu0 %v434, 126
          %v462 = vpop.permute.xlu0 %461
          %463 = vrot.lane.b32.xlu0 %v435, 126
          %v464 = vpop.permute.xlu0 %463
          %465 = vrot.lane.b32.xlu0 %v436, 126
          %v466 = vpop.permute.xlu0 %465
          %vm467 = vcmask 1031168
          %v468 = vsel %vm467, %v448, %v450
          %v469 = vsel %vm467, %v450, %v452
          %v470 = vsel %vm467, %v452, %v454
          %v471 = vsel %vm467, %v454, %v456
          %v472 = vsel %vm467, %v458, %v460
          %v473 = vsel %vm467, %v460, %v462
          %v474 = vsel %vm467, %v462, %v464
          %v475 = vsel %vm467, %v464, %v466
          %v486 = vadd.f32 %v409, %v468
          %v487 = vadd.f32 %v410, %v469
          %v488 = vadd.f32 %v411, %v470
          %v489 = vadd.f32 %v412, %v471
          %v490 = vadd.f32 %v413, %v456
          %v491 = vadd.f32 %v414, %v472
          %v492 = vadd.f32 %v415, %v473
          %v493 = vadd.f32 %v416, %v474
          %v494 = vadd.f32 %v417, %v475
          %v495 = vadd.f32 %v418, %v466
          %496 = vset.pattern.permute.xlu0 3
          %497 = vperm.xlu0 %496, %v275
          %v498 = vpop.permute.xlu0 %497
          %500 = vset.pattern.permute.xlu0 3
          %501 = vperm.xlu0 %500, %v276
          %v502 = vpop.permute.xlu0 %501
          %v504 = vmul.f32 %v498, %v310
          %v505 = vmul.f32 %v498, %v314
          %v506 = vmul.f32 %v498, %v318
          %v507 = vmul.f32 %v498, %v322
          %v508 = vmul.f32 %v498, %v326
          %v509 = vmul.f32 %v502, %v310
          %v510 = vmul.f32 %v502, %v314
          %v511 = vmul.f32 %v502, %v318
          %v512 = vmul.f32 %v502, %v322
          %v513 = vmul.f32 %v502, %v326
          %524 = vrot.lane.b32.xlu0 %v504, 125
          %v525 = vpop.permute.xlu0 %524
          %526 = vrot.lane.b32.xlu0 %v505, 125
          %v527 = vpop.permute.xlu0 %526
          %528 = vrot.lane.b32.xlu0 %v506, 125
          %v529 = vpop.permute.xlu0 %528
          %530 = vrot.lane.b32.xlu0 %v507, 125
          %v531 = vpop.permute.xlu0 %530
          %532 = vrot.lane.b32.xlu0 %v508, 125
          %v533 = vpop.permute.xlu0 %532
          %534 = vrot.lane.b32.xlu0 %v509, 125
          %v535 = vpop.permute.xlu0 %534
          %536 = vrot.lane.b32.xlu0 %v510, 125
          %v537 = vpop.permute.xlu0 %536
          %538 = vrot.lane.b32.xlu0 %v511, 125
          %v539 = vpop.permute.xlu0 %538
          %540 = vrot.lane.b32.xlu0 %v512, 125
          %v541 = vpop.permute.xlu0 %540
          %542 = vrot.lane.b32.xlu0 %v513, 125
          %v543 = vpop.permute.xlu0 %542
          %vm544 = vcmask 1022976
          %v545 = vsel %vm544, %v525, %v527
          %v546 = vsel %vm544, %v527, %v529
          %v547 = vsel %vm544, %v529, %v531
          %v548 = vsel %vm544, %v531, %v533
          %v549 = vsel %vm544, %v535, %v537
          %v550 = vsel %vm544, %v537, %v539
          %v551 = vsel %vm544, %v539, %v541
          %v552 = vsel %vm544, %v541, %v543
          %v563 = vadd.f32 %v486, %v545
          %v564 = vadd.f32 %v487, %v546
          %v565 = vadd.f32 %v488, %v547
          %v566 = vadd.f32 %v489, %v548
          %v567 = vadd.f32 %v490, %v533
          %v568 = vadd.f32 %v491, %v549
          %v569 = vadd.f32 %v492, %v550
          %v570 = vadd.f32 %v493, %v551
          %v571 = vadd.f32 %v494, %v552
          %v572 = vadd.f32 %v495, %v543
          %573 = vset.pattern.permute.xlu0 4
          %574 = vperm.xlu0 %573, %v275
          %v575 = vpop.permute.xlu0 %574
          %577 = vset.pattern.permute.xlu0 4
          %578 = vperm.xlu0 %577, %v276
          %v579 = vpop.permute.xlu0 %578
          %v581 = vmul.f32 %v575, %v310
          %v582 = vmul.f32 %v575, %v314
          %v583 = vmul.f32 %v575, %v318
          %v584 = vmul.f32 %v575, %v322
          %v585 = vmul.f32 %v575, %v326
          %v586 = vmul.f32 %v579, %v310
          %v587 = vmul.f32 %v579, %v314
          %v588 = vmul.f32 %v579, %v318
          %v589 = vmul.f32 %v579, %v322
          %v590 = vmul.f32 %v579, %v326
          %601 = vrot.lane.b32.xlu0 %v581, 124
          %v602 = vpop.permute.xlu0 %601
          %603 = vrot.lane.b32.xlu0 %v582, 124
          %v604 = vpop.permute.xlu0 %603
          %605 = vrot.lane.b32.xlu0 %v583, 124
          %v606 = vpop.permute.xlu0 %605
          %607 = vrot.lane.b32.xlu0 %v584, 124
          %v608 = vpop.permute.xlu0 %607
          %609 = vrot.lane.b32.xlu0 %v585, 124
          %v610 = vpop.permute.xlu0 %609
          %611 = vrot.lane.b32.xlu0 %v586, 124
          %v612 = vpop.permute.xlu0 %611
          %613 = vrot.lane.b32.xlu0 %v587, 124
          %v614 = vpop.permute.xlu0 %613
          %615 = vrot.lane.b32.xlu0 %v588, 124
          %v616 = vpop.permute.xlu0 %615
          %617 = vrot.lane.b32.xlu0 %v589, 124
          %v618 = vpop.permute.xlu0 %617
          %619 = vrot.lane.b32.xlu0 %v590, 124
          %v620 = vpop.permute.xlu0 %619
          %vm621 = vcmask 1014784
          %v622 = vsel %vm621, %v602, %v604
          %v623 = vsel %vm621, %v604, %v606
          %v624 = vsel %vm621, %v606, %v608
          %v625 = vsel %vm621, %v608, %v610
          %v626 = vsel %vm621, %v612, %v614
          %v627 = vsel %vm621, %v614, %v616
          %v628 = vsel %vm621, %v616, %v618
          %v629 = vsel %vm621, %v618, %v620
          %v640 = vadd.f32 %v563, %v622
          %v641 = vadd.f32 %v564, %v623
          %v642 = vadd.f32 %v565, %v624
          %v643 = vadd.f32 %v566, %v625
          %v644 = vadd.f32 %v567, %v610
          %v645 = vadd.f32 %v568, %v626
          %v646 = vadd.f32 %v569, %v627
          %v647 = vadd.f32 %v570, %v628
          %v648 = vadd.f32 %v571, %v629
          %v649 = vadd.f32 %v572, %v620
          %651 = vset.pattern.permute.xlu0 0
          %652 = vperm.xlu0 %651, %v277
          %v653 = vpop.permute.xlu0 %652
          %656 = vset.pattern.permute.xlu0 0
          %657 = vperm.xlu0 %656, %v278
          %v658 = vpop.permute.xlu0 %657
          %v660 = vadd.f32 %v640, %v653
          %v661 = vadd.f32 %v641, %v653
          %v662 = vadd.f32 %v642, %v653
          %v663 = vadd.f32 %v643, %v653
          %v664 = vadd.f32 %v644, %v653
          %v665 = vadd.f32 %v645, %v658
          %v666 = vadd.f32 %v646, %v658
          %v667 = vadd.f32 %v647, %v658
          %v668 = vadd.f32 %v648, %v658
          %v669 = vadd.f32 %v649, %v658
          %v670 = vmax.f32 %v660, 0.0
          %v671 = vmax.f32 %v661, 0.0
          %v672 = vmax.f32 %v662, 0.0
          %v673 = vmax.f32 %v663, 0.0
          %v674 = vmax.f32 %v664, 0.0
          %v675 = vmax.f32 %v665, 0.0
          %v676 = vmax.f32 %v666, 0.0
          %v677 = vmax.f32 %v667, 0.0
          %v678 = vmax.f32 %v668, 0.0
          %v679 = vmax.f32 %v669, 0.0
          %v680 = vpack.c.bf16 %v675, %v670
          %v681 = vpack.c.bf16 %v676, %v671
          %v682 = vpack.c.bf16 %v677, %v672
          %v683 = vpack.c.bf16 %v678, %v673
          %v684 = vpack.c.bf16 %v679, %v674
          %690 = vrot.lane.b32.xlu0 %v680, 127
          %v691 = vpop.permute.xlu0 %690
          %692 = vrot.lane.b32.xlu0 %v681, 127
          %v693 = vpop.permute.xlu0 %692
          %694 = vrot.lane.b32.xlu0 %v682, 127
          %v695 = vpop.permute.xlu0 %694
          %696 = vrot.lane.b32.xlu0 %v683, 127
          %v697 = vpop.permute.xlu0 %696
          %698 = vrot.lane.b32.xlu0 %v684, 127
          %v699 = vpop.permute.xlu0 %698
          %vm700 = vcmask 1039360
          %v701 = vsel %vm700, %v691, %v693
          %v702 = vsel %vm700, %v693, %v695
          %v703 = vsel %vm700, %v695, %v697
          %v704 = vsel %vm700, %v697, %v699
          %710 = vrot.lane.b32.xlu0 %v680, 126
          %v711 = vpop.permute.xlu0 %710
          %712 = vrot.lane.b32.xlu0 %v681, 126
          %v713 = vpop.permute.xlu0 %712
          %714 = vrot.lane.b32.xlu0 %v682, 126
          %v715 = vpop.permute.xlu0 %714
          %716 = vrot.lane.b32.xlu0 %v683, 126
          %v717 = vpop.permute.xlu0 %716
          %718 = vrot.lane.b32.xlu0 %v684, 126
          %v719 = vpop.permute.xlu0 %718
          %vm720 = vcmask 1031168
          %v721 = vsel %vm720, %v711, %v713
          %v722 = vsel %vm720, %v713, %v715
          %v723 = vsel %vm720, %v715, %v717
          %v724 = vsel %vm720, %v717, %v719
          %730 = vrot.lane.b32.xlu0 %v680, 125
          %v731 = vpop.permute.xlu0 %730
          %732 = vrot.lane.b32.xlu0 %v681, 125
          %v733 = vpop.permute.xlu0 %732
          %734 = vrot.lane.b32.xlu0 %v682, 125
          %v735 = vpop.permute.xlu0 %734
          %736 = vrot.lane.b32.xlu0 %v683, 125
          %v737 = vpop.permute.xlu0 %736
          %738 = vrot.lane.b32.xlu0 %v684, 125
          %v739 = vpop.permute.xlu0 %738
          %vm740 = vcmask 1022976
          %v741 = vsel %vm740, %v731, %v733
          %v742 = vsel %vm740, %v733, %v735
          %v743 = vsel %vm740, %v735, %v737
          %v744 = vsel %vm740, %v737, %v739
          %750 = vrot.lane.b32.xlu0 %v680, 124
          %v751 = vpop.permute.xlu0 %750
          %752 = vrot.lane.b32.xlu0 %v681, 124
          %v753 = vpop.permute.xlu0 %752
          %754 = vrot.lane.b32.xlu0 %v682, 124
          %v755 = vpop.permute.xlu0 %754
          %756 = vrot.lane.b32.xlu0 %v683, 124
          %v757 = vpop.permute.xlu0 %756
          %758 = vrot.lane.b32.xlu0 %v684, 124
          %v759 = vpop.permute.xlu0 %758
          %vm760 = vcmask 1014784
          %v761 = vsel %vm760, %v751, %v753
          %v762 = vsel %vm760, %v753, %v755
          %v763 = vsel %vm760, %v755, %v757
          %v764 = vsel %vm760, %v757, %v759
          %770 = vrot.lane.b32.xlu0 %v680, 123
          %v771 = vpop.permute.xlu0 %770
          %772 = vrot.lane.b32.xlu0 %v681, 123
          %v773 = vpop.permute.xlu0 %772
          %774 = vrot.lane.b32.xlu0 %v682, 123
          %v775 = vpop.permute.xlu0 %774
          %776 = vrot.lane.b32.xlu0 %v683, 123
          %v777 = vpop.permute.xlu0 %776
          %778 = vrot.lane.b32.xlu0 %v684, 123
          %v779 = vpop.permute.xlu0 %778
          %vm780 = vcmask 1006592
          %v781 = vsel %vm780, %v771, %v773
          %v782 = vsel %vm780, %v773, %v775
          %v783 = vsel %vm780, %v775, %v777
          %v784 = vsel %vm780, %v777, %v779
          %790 = vrot.lane.b32.xlu0 %v680, 122
          %v791 = vpop.permute.xlu0 %790
          %792 = vrot.lane.b32.xlu0 %v681, 122
          %v793 = vpop.permute.xlu0 %792
          %794 = vrot.lane.b32.xlu0 %v682, 122
          %v795 = vpop.permute.xlu0 %794
          %796 = vrot.lane.b32.xlu0 %v683, 122
          %v797 = vpop.permute.xlu0 %796
          %798 = vrot.lane.b32.xlu0 %v684, 122
          %v799 = vpop.permute.xlu0 %798
          %vm800 = vcmask 998400
          %v801 = vsel %vm800, %v791, %v793
          %v802 = vsel %vm800, %v793, %v795
          %v803 = vsel %vm800, %v795, %v797
          %v804 = vsel %vm800, %v797, %v799
          %811 = vset.pattern.permute.xlu0 0
          %812 = vperm.xlu0 %811, %v280
          %v813 = vpop.permute.xlu0 %812
          %vm815 = vcmask 916480
          %v817 = vsel %vm815, %v279, 0
          %819 = vmatprep.subr.bf16.mxu0 %v681
          %820 = vmatpush1.bf16.msra.mxu0 %v680
          %821 = vmatprep.subr.bf16.mxu0 %v702
          %822 = vmatpush1.bf16.msra.mxu0 %v701
          %823 = vmatprep.subr.bf16.mxu0 %v722
          %824 = vmatpush1.bf16.msra.mxu0 %v721
          %825 = vmatprep.subr.bf16.mxu0 %v742
          %826 = vmatpush1.bf16.msra.mxu0 %v741
          %827 = vmatprep.subr.bf16.mxu0 %v762
          %828 = vmatpush1.bf16.msra.mxu0 %v761
          %829 = vmatprep.subr.bf16.mxu0 %v782
          %830 = vmatpush1.bf16.msra.mxu0 %v781
          %831 = vmatprep.subr.bf16.mxu0 %v802
          %832 = vmatpush1.bf16.msra.mxu0 %v801
          %833 = vmatprep.subr.bf16.mxu0 0
          %834 = vmatpush1.bf16.msra.mxu0 0
          %835 = vmatprep.subr.bf16.mxu0 0
          %836 = vmatpush1.bf16.msra.mxu0 0
          %837 = vmatprep.subr.bf16.mxu0 0
          %838 = vmatpush1.bf16.msra.mxu0 0
          %839 = vmatprep.subr.bf16.mxu0 0
          %840 = vmatpush1.bf16.msra.mxu0 0
          %841 = vmatprep.subr.bf16.mxu0 0
          %842 = vmatpush1.bf16.msra.mxu0 0
          %843 = vmatprep.subr.bf16.mxu0 0
          %844 = vmatpush1.bf16.msra.mxu0 0
          %845 = vmatprep.subr.bf16.mxu0 0
          %846 = vmatpush1.bf16.msra.mxu0 0
          %847 = vmatprep.subr.bf16.mxu0 0
          %848 = vmatpush1.bf16.msra.mxu0 0
          %849 = vmatprep.subr.bf16.mxu0 0
          %850 = vmatpush1.bf16.msra.mxu0 0
          %851 = vmatprep.mubr.bf16.mxu0 0
          %852 = vmatmul.mubr.bf16.gmra.mrb[0].mxu0 %v817
          %v853 = vpop.f32.mrb[0].mxu0
          %v854 = vadd.f32 %v813, %v853
          %v855 = vpop.f32.mrb[0].mxu0
          %v856 = vadd.f32 %v813, %v855
          %v857 = vpop.f32.mrb[0].mxu0
          %v858 = vpop.f32.mrb[0].mxu0
          %859 = vdwg.mxu0
          %860 = vmatprep.subr.bf16.mxu0 %v683
          %861 = vmatpush1.bf16.msra.mxu0 %v682
          %862 = vmatprep.subr.bf16.mxu0 %v704
          %863 = vmatpush1.bf16.msra.mxu0 %v703
          %864 = vmatprep.subr.bf16.mxu0 %v724
          %865 = vmatpush1.bf16.msra.mxu0 %v723
          %866 = vmatprep.subr.bf16.mxu0 %v744
          %867 = vmatpush1.bf16.msra.mxu0 %v743
          %868 = vmatprep.subr.bf16.mxu0 %v764
          %869 = vmatpush1.bf16.msra.mxu0 %v763
          %870 = vmatprep.subr.bf16.mxu0 %v784
          %871 = vmatpush1.bf16.msra.mxu0 %v783
          %872 = vmatprep.subr.bf16.mxu0 %v804
          %873 = vmatpush1.bf16.msra.mxu0 %v803
          %874 = vmatprep.subr.bf16.mxu0 0
          %875 = vmatpush1.bf16.msra.mxu0 0
          %876 = vmatprep.subr.bf16.mxu0 0
          %877 = vmatpush1.bf16.msra.mxu0 0
          %878 = vmatprep.subr.bf16.mxu0 0
          %879 = vmatpush1.bf16.msra.mxu0 0
          %880 = vmatprep.subr.bf16.mxu0 0
          %881 = vmatpush1.bf16.msra.mxu0 0
          %882 = vmatprep.subr.bf16.mxu0 0
          %883 = vmatpush1.bf16.msra.mxu0 0
          %884 = vmatprep.subr.bf16.mxu0 0
          %885 = vmatpush1.bf16.msra.mxu0 0
          %886 = vmatprep.subr.bf16.mxu0 0
          %887 = vmatpush1.bf16.msra.mxu0 0
          %888 = vmatprep.subr.bf16.mxu0 0
          %889 = vmatpush1.bf16.msra.mxu0 0
          %890 = vmatprep.subr.bf16.mxu0 0
          %891 = vmatpush1.bf16.msra.mxu0 0
          %892 = vmatprep.mubr.bf16.mxu0 0
          %893 = vmatmul.mubr.bf16.gmra.mrb[0].mxu0 %v817
          %v894 = vpop.f32.mrb[0].mxu0
          %v895 = vadd.f32 %v813, %v894
          %v896 = vpop.f32.mrb[0].mxu0
          %v897 = vadd.f32 %v813, %v896
          %v898 = vpop.f32.mrb[0].mxu0
          %v899 = vpop.f32.mrb[0].mxu0
          %900 = vdwg.mxu0
          %901 = vmatprep.subr.bf16.mxu0 0
          %902 = vmatpush1.bf16.msra.mxu0 %v684
          %903 = vmatprep.subr.bf16.mxu0 0
          %904 = vmatpush1.bf16.msra.mxu0 %v699
          %905 = vmatprep.subr.bf16.mxu0 0
          %906 = vmatpush1.bf16.msra.mxu0 %v719
          %907 = vmatprep.subr.bf16.mxu0 0
          %908 = vmatpush1.bf16.msra.mxu0 %v739
          %909 = vmatprep.subr.bf16.mxu0 0
          %910 = vmatpush1.bf16.msra.mxu0 %v759
          %911 = vmatprep.subr.bf16.mxu0 0
          %912 = vmatpush1.bf16.msra.mxu0 %v779
          %913 = vmatprep.subr.bf16.mxu0 0
          %914 = vmatpush1.bf16.msra.mxu0 %v799
          %915 = vmatprep.subr.bf16.mxu0 0
          %916 = vmatpush1.bf16.msra.mxu0 0
          %917 = vmatprep.subr.bf16.mxu0 0
          %918 = vmatpush1.bf16.msra.mxu0 0
          %919 = vmatprep.subr.bf16.mxu0 0
          %920 = vmatpush1.bf16.msra.mxu0 0
          %921 = vmatprep.subr.bf16.mxu0 0
          %922 = vmatpush1.bf16.msra.mxu0 0
          %923 = vmatprep.subr.bf16.mxu0 0
          %924 = vmatpush1.bf16.msra.mxu0 0
          %925 = vmatprep.subr.bf16.mxu0 0
          %926 = vmatpush1.bf16.msra.mxu0 0
          %927 = vmatprep.subr.bf16.mxu0 0
          %928 = vmatpush1.bf16.msra.mxu0 0
          %929 = vmatprep.subr.bf16.mxu0 0
          %930 = vmatpush1.bf16.msra.mxu0 0
          %931 = vmatprep.subr.bf16.mxu0 0
          %932 = vmatpush1.bf16.msra.mxu0 0
          %933 = vmatprep.mubr.bf16.mxu0 0
          %934 = vmatmul.mubr.bf16.gmra.mrb[0].mxu0 %v817
          %v935 = vpop.f32.mrb[0].mxu0
          %v936 = vadd.f32 %v813, %v935
          %v937 = vpop.f32.mrb[0].mxu0
          %v938 = vpop.f32.mrb[0].mxu0
          %v939 = vpop.f32.mrb[0].mxu0
          %940 = vdwg.mxu0
          %v941 = vmax.f32 %v854, 0.0
          %v942 = vmax.f32 %v856, 0.0
          %v943 = vmax.f32 %v895, 0.0
          %v944 = vmax.f32 %v897, 0.0
          %v945 = vmax.f32 %v936, 0.0
          %951 = vrot.lane.b32.xlu0 %v941, 127
          %v952 = vpop.permute.xlu0 %951
          %953 = vrot.lane.b32.xlu0 %v942, 127
          %v954 = vpop.permute.xlu0 %953
          %955 = vrot.lane.b32.xlu0 %v943, 127
          %v956 = vpop.permute.xlu0 %955
          %957 = vrot.lane.b32.xlu0 %v944, 127
          %v958 = vpop.permute.xlu0 %957
          %959 = vrot.lane.b32.xlu0 %v945, 127
          %v960 = vpop.permute.xlu0 %959
          %v961 = vsel %vm390, %v952, %v954
          %v962 = vsel %vm390, %v954, %v956
          %v963 = vsel %vm390, %v956, %v958
          %v964 = vsel %vm390, %v958, %v960
          %969 = vrot.lane.b32.xlu0 %v941, 126
          %v970 = vpop.permute.xlu0 %969
          %971 = vrot.lane.b32.xlu0 %v942, 126
          %v972 = vpop.permute.xlu0 %971
          %973 = vrot.lane.b32.xlu0 %v943, 126
          %v974 = vpop.permute.xlu0 %973
          %975 = vrot.lane.b32.xlu0 %v944, 126
          %v976 = vpop.permute.xlu0 %975
          %977 = vrot.lane.b32.xlu0 %v945, 126
          %v978 = vpop.permute.xlu0 %977
          %v979 = vsel %vm467, %v970, %v972
          %v980 = vsel %vm467, %v972, %v974
          %v981 = vsel %vm467, %v974, %v976
          %v982 = vsel %vm467, %v976, %v978
          %987 = vrot.lane.b32.xlu0 %v941, 125
          %v988 = vpop.permute.xlu0 %987
          %989 = vrot.lane.b32.xlu0 %v942, 125
          %v990 = vpop.permute.xlu0 %989
          %991 = vrot.lane.b32.xlu0 %v943, 125
          %v992 = vpop.permute.xlu0 %991
          %993 = vrot.lane.b32.xlu0 %v944, 125
          %v994 = vpop.permute.xlu0 %993
          %995 = vrot.lane.b32.xlu0 %v945, 125
          %v996 = vpop.permute.xlu0 %995
          %v997 = vsel %vm544, %v988, %v990
          %v998 = vsel %vm544, %v990, %v992
          %v999 = vsel %vm544, %v992, %v994
          %v1000 = vsel %vm544, %v994, %v996
          %1005 = vrot.lane.b32.xlu0 %v941, 124
          %v1006 = vpop.permute.xlu0 %1005
          %1007 = vrot.lane.b32.xlu0 %v942, 124
          %v1008 = vpop.permute.xlu0 %1007
          %1009 = vrot.lane.b32.xlu0 %v943, 124
          %v1010 = vpop.permute.xlu0 %1009
          %1011 = vrot.lane.b32.xlu0 %v944, 124
          %v1012 = vpop.permute.xlu0 %1011
          %1013 = vrot.lane.b32.xlu0 %v945, 124
          %v1014 = vpop.permute.xlu0 %1013
          %v1015 = vsel %vm621, %v1006, %v1008
          %v1016 = vsel %vm621, %v1008, %v1010
          %v1017 = vsel %vm621, %v1010, %v1012
          %v1018 = vsel %vm621, %v1012, %v1014
          %1023 = vrot.lane.b32.xlu0 %v941, 123
          %v1024 = vpop.permute.xlu0 %1023
          %1025 = vrot.lane.b32.xlu0 %v942, 123
          %v1026 = vpop.permute.xlu0 %1025
          %1027 = vrot.lane.b32.xlu0 %v943, 123
          %v1028 = vpop.permute.xlu0 %1027
          %1029 = vrot.lane.b32.xlu0 %v944, 123
          %v1030 = vpop.permute.xlu0 %1029
          %1031 = vrot.lane.b32.xlu0 %v945, 123
          %v1032 = vpop.permute.xlu0 %1031
          %vm1033 = vcmask 1006592
          %v1034 = vsel %vm1033, %v1024, %v1026
          %v1035 = vsel %vm1033, %v1026, %v1028
          %v1036 = vsel %vm1033, %v1028, %v1030
          %v1037 = vsel %vm1033, %v1030, %v1032
          %1042 = vrot.lane.b32.xlu0 %v941, 122
          %v1043 = vpop.permute.xlu0 %1042
          %1044 = vrot.lane.b32.xlu0 %v942, 122
          %v1045 = vpop.permute.xlu0 %1044
          %1046 = vrot.lane.b32.xlu0 %v943, 122
          %v1047 = vpop.permute.xlu0 %1046
          %1048 = vrot.lane.b32.xlu0 %v944, 122
          %v1049 = vpop.permute.xlu0 %1048
          %1050 = vrot.lane.b32.xlu0 %v945, 122
          %v1051 = vpop.permute.xlu0 %1050
          %vm1052 = vcmask 998400
          %v1053 = vsel %vm1052, %v1043, %v1045
          %v1054 = vsel %vm1052, %v1045, %v1047
          %v1055 = vsel %vm1052, %v1047, %v1049
          %v1056 = vsel %vm1052, %v1049, %v1051
          %1061 = vrot.lane.b32.xlu0 %v941, 121
          %v1062 = vpop.permute.xlu0 %1061
          %1063 = vrot.lane.b32.xlu0 %v942, 121
          %v1064 = vpop.permute.xlu0 %1063
          %1065 = vrot.lane.b32.xlu0 %v943, 121
          %v1066 = vpop.permute.xlu0 %1065
          %1067 = vrot.lane.b32.xlu0 %v944, 121
          %v1068 = vpop.permute.xlu0 %1067
          %1069 = vrot.lane.b32.xlu0 %v945, 121
          %v1070 = vpop.permute.xlu0 %1069
          %vm1071 = vcmask 990208
          %v1072 = vsel %vm1071, %v1062, %v1064
          %v1073 = vsel %vm1071, %v1064, %v1066
          %v1074 = vsel %vm1071, %v1066, %v1068
          %v1075 = vsel %vm1071, %v1068, %v1070
          %v1080 = vpack.c.bf16 %v961, %v941
          %v1081 = vpack.c.bf16 %v962, %v942
          %v1082 = vpack.c.bf16 %v963, %v943
          %v1083 = vpack.c.bf16 %v964, %v944
          %v1084 = vpack.c.bf16 %v997, %v979
          %v1085 = vpack.c.bf16 %v998, %v980
          %v1086 = vpack.c.bf16 %v999, %v981
          %v1087 = vpack.c.bf16 %v1000, %v982
          %v1088 = vpack.c.bf16 %v1034, %v1015
          %v1089 = vpack.c.bf16 %v1035, %v1016
          %v1090 = vpack.c.bf16 %v1036, %v1017
          %v1091 = vpack.c.bf16 %v1037, %v1018
          %v1092 = vpack.c.bf16 %v1072, %v1053
          %v1093 = vpack.c.bf16 %v1073, %v1054
          %v1094 = vpack.c.bf16 %v1074, %v1055
          %v1095 = vpack.c.bf16 %v1075, %v1056
          %v1103 = vpack.c.bf16 %v960, %v945
          %v1104 = vpack.c.bf16 %v996, %v978
          %v1105 = vpack.c.bf16 %v1032, %v1014
          %v1106 = vpack.c.bf16 %v1070, %v1051
          %v1109 = vunpack.c.l.b16 %v281
          %v1110 = vunpack.c.l.b16 %v282
          %v1111 = vpack.c.b16 %v1110, %v1109
          %1112 = vrot.lane.b32.xlu0 %v1111, 64
          %v1113 = vpop.permute.xlu0 %1112
          %1134 = vrot.lane.b32.xlu0 %v1080, 120
          %v1135 = vpop.permute.xlu0 %1134
          %1136 = vrot.lane.b32.xlu0 %v1081, 120
          %v1137 = vpop.permute.xlu0 %1136
          %1138 = vrot.lane.b32.xlu0 %v1082, 120
          %v1139 = vpop.permute.xlu0 %1138
          %1140 = vrot.lane.b32.xlu0 %v1083, 120
          %v1141 = vpop.permute.xlu0 %1140
          %1142 = vrot.lane.b32.xlu0 %v1103, 120
          %v1143 = vpop.permute.xlu0 %1142
          %1144 = vrot.lane.b32.xlu0 %v1084, 120
          %v1145 = vpop.permute.xlu0 %1144
          %1146 = vrot.lane.b32.xlu0 %v1085, 120
          %v1147 = vpop.permute.xlu0 %1146
          %1148 = vrot.lane.b32.xlu0 %v1086, 120
          %v1149 = vpop.permute.xlu0 %1148
          %1150 = vrot.lane.b32.xlu0 %v1087, 120
          %v1151 = vpop.permute.xlu0 %1150
          %1152 = vrot.lane.b32.xlu0 %v1104, 120
          %v1153 = vpop.permute.xlu0 %1152
          %1154 = vrot.lane.b32.xlu0 %v1088, 120
          %v1155 = vpop.permute.xlu0 %1154
          %1156 = vrot.lane.b32.xlu0 %v1089, 120
          %v1157 = vpop.permute.xlu0 %1156
          %1158 = vrot.lane.b32.xlu0 %v1090, 120
          %v1159 = vpop.permute.xlu0 %1158
          %1160 = vrot.lane.b32.xlu0 %v1091, 120
          %v1161 = vpop.permute.xlu0 %1160
          %1162 = vrot.lane.b32.xlu0 %v1105, 120
          %v1163 = vpop.permute.xlu0 %1162
          %1164 = vrot.lane.b32.xlu0 %v1092, 120
          %v1165 = vpop.permute.xlu0 %1164
          %1166 = vrot.lane.b32.xlu0 %v1093, 120
          %v1167 = vpop.permute.xlu0 %1166
          %1168 = vrot.lane.b32.xlu0 %v1094, 120
          %v1169 = vpop.permute.xlu0 %1168
          %1170 = vrot.lane.b32.xlu0 %v1095, 120
          %v1171 = vpop.permute.xlu0 %1170
          %1172 = vrot.lane.b32.xlu0 %v1106, 120
          %v1173 = vpop.permute.xlu0 %1172
          %vm1174 = vcmask 982016
          %v1175 = vsel %vm1174, %v1135, %v1137
          %v1176 = vsel %vm1174, %v1137, %v1139
          %v1177 = vsel %vm1174, %v1139, %v1141
          %v1178 = vsel %vm1174, %v1141, %v1143
          %v1179 = vsel %vm1174, %v1145, %v1147
          %v1180 = vsel %vm1174, %v1147, %v1149
          %v1181 = vsel %vm1174, %v1149, %v1151
          %v1182 = vsel %vm1174, %v1151, %v1153
          %v1183 = vsel %vm1174, %v1155, %v1157
          %v1184 = vsel %vm1174, %v1157, %v1159
          %v1185 = vsel %vm1174, %v1159, %v1161
          %v1186 = vsel %vm1174, %v1161, %v1163
          %v1187 = vsel %vm1174, %v1165, %v1167
          %v1188 = vsel %vm1174, %v1167, %v1169
          %v1189 = vsel %vm1174, %v1169, %v1171
          %v1190 = vsel %vm1174, %v1171, %v1173
          %vm1207 = vcmask 523264
          %v1209 = vsel %vm1207, %v1113, 0
          %1211 = vmatprep.subr.bf16.mxu0 %v1176
          %1212 = vmatpush1.bf16.msra.mxu0 %v1175
          %1213 = vmatprep.subr.bf16.mxu0 %v1180
          %1214 = vmatpush1.bf16.msra.mxu0 %v1179
          %1215 = vmatprep.subr.bf16.mxu0 %v1184
          %1216 = vmatpush1.bf16.msra.mxu0 %v1183
          %1217 = vmatprep.subr.bf16.mxu0 %v1188
          %1218 = vmatpush1.bf16.msra.mxu0 %v1187
          %1219 = vmatprep.subr.bf16.mxu0 0
          %1220 = vmatpush1.bf16.msra.mxu0 0
          %1221 = vmatprep.subr.bf16.mxu0 0
          %1222 = vmatpush1.bf16.msra.mxu0 0
          %1223 = vmatprep.subr.bf16.mxu0 0
          %1224 = vmatpush1.bf16.msra.mxu0 0
          %1225 = vmatprep.subr.bf16.mxu0 0
          %1226 = vmatpush1.bf16.msra.mxu0 0
          %1227 = vmatprep.subr.bf16.mxu0 0
          %1228 = vmatpush1.bf16.msra.mxu0 0
          %1229 = vmatprep.subr.bf16.mxu0 0
          %1230 = vmatpush1.bf16.msra.mxu0 0
          %1231 = vmatprep.subr.bf16.mxu0 0
          %1232 = vmatpush1.bf16.msra.mxu0 0
          %1233 = vmatprep.subr.bf16.mxu0 0
          %1234 = vmatpush1.bf16.msra.mxu0 0
          %1235 = vmatprep.subr.bf16.mxu0 0
          %1236 = vmatpush1.bf16.msra.mxu0 0
          %1237 = vmatprep.subr.bf16.mxu0 0
          %1238 = vmatpush1.bf16.msra.mxu0 0
          %1239 = vmatprep.subr.bf16.mxu0 0
          %1240 = vmatpush1.bf16.msra.mxu0 0
          %1241 = vmatprep.subr.bf16.mxu0 0
          %1242 = vmatpush1.bf16.msra.mxu0 0
          %1243 = vmatprep.mubr.bf16.mxu0 0
          %1244 = vmatmul.mubr.bf16.gmra.mrb[0].mxu0 %v1209
          %v1245 = vpop.f32.mrb[0].mxu0
          %v1246 = vadd.f32 0.0, %v1245
          %v1247 = vpop.f32.mrb[0].mxu0
          %v1248 = vadd.f32 0.0, %v1247
          %v1249 = vpop.f32.mrb[0].mxu0
          %v1250 = vadd.f32 0.0, %v1249
          %v1251 = vpop.f32.mrb[0].mxu0
          %v1252 = vadd.f32 0.0, %v1251
          %1253 = vdwg.mxu0
          %1254 = vmatprep.subr.bf16.mxu0 %v1178
          %1255 = vmatpush1.bf16.msra.mxu0 %v1177
          %1256 = vmatprep.subr.bf16.mxu0 %v1182
          %1257 = vmatpush1.bf16.msra.mxu0 %v1181
          %1258 = vmatprep.subr.bf16.mxu0 %v1186
          %1259 = vmatpush1.bf16.msra.mxu0 %v1185
          %1260 = vmatprep.subr.bf16.mxu0 %v1190
          %1261 = vmatpush1.bf16.msra.mxu0 %v1189
          %1262 = vmatprep.subr.bf16.mxu0 0
          %1263 = vmatpush1.bf16.msra.mxu0 0
          %1264 = vmatprep.subr.bf16.mxu0 0
          %1265 = vmatpush1.bf16.msra.mxu0 0
          %1266 = vmatprep.subr.bf16.mxu0 0
          %1267 = vmatpush1.bf16.msra.mxu0 0
          %1268 = vmatprep.subr.bf16.mxu0 0
          %1269 = vmatpush1.bf16.msra.mxu0 0
          %1270 = vmatprep.subr.bf16.mxu0 0
          %1271 = vmatpush1.bf16.msra.mxu0 0
          %1272 = vmatprep.subr.bf16.mxu0 0
          %1273 = vmatpush1.bf16.msra.mxu0 0
          %1274 = vmatprep.subr.bf16.mxu0 0
          %1275 = vmatpush1.bf16.msra.mxu0 0
          %1276 = vmatprep.subr.bf16.mxu0 0
          %1277 = vmatpush1.bf16.msra.mxu0 0
          %1278 = vmatprep.subr.bf16.mxu0 0
          %1279 = vmatpush1.bf16.msra.mxu0 0
          %1280 = vmatprep.subr.bf16.mxu0 0
          %1281 = vmatpush1.bf16.msra.mxu0 0
          %1282 = vmatprep.subr.bf16.mxu0 0
          %1283 = vmatpush1.bf16.msra.mxu0 0
          %1284 = vmatprep.subr.bf16.mxu0 0
          %1285 = vmatpush1.bf16.msra.mxu0 0
          %1286 = vmatprep.mubr.bf16.mxu0 0
          %1287 = vmatmul.mubr.bf16.gmra.mrb[0].mxu0 %v1209
          %v1288 = vpop.f32.mrb[0].mxu0
          %v1289 = vadd.f32 0.0, %v1288
          %v1290 = vpop.f32.mrb[0].mxu0
          %v1291 = vadd.f32 0.0, %v1290
          %v1292 = vpop.f32.mrb[0].mxu0
          %v1293 = vadd.f32 0.0, %v1292
          %v1294 = vpop.f32.mrb[0].mxu0
          %v1295 = vadd.f32 0.0, %v1294
          %1296 = vdwg.mxu0
          %v1298 = vsel %vm1207, %v1111, 0
          %1300 = vmatprep.subr.bf16.mxu0 %v1081
          %1301 = vmatpush1.bf16.msra.mxu0 %v1080
          %1302 = vmatprep.subr.bf16.mxu0 %v1085
          %1303 = vmatpush1.bf16.msra.mxu0 %v1084
          %1304 = vmatprep.subr.bf16.mxu0 %v1089
          %1305 = vmatpush1.bf16.msra.mxu0 %v1088
          %1306 = vmatprep.subr.bf16.mxu0 %v1093
          %1307 = vmatpush1.bf16.msra.mxu0 %v1092
          %1308 = vmatprep.subr.bf16.mxu0 0
          %1309 = vmatpush1.bf16.msra.mxu0 0
          %1310 = vmatprep.subr.bf16.mxu0 0
          %1311 = vmatpush1.bf16.msra.mxu0 0
          %1312 = vmatprep.subr.bf16.mxu0 0
          %1313 = vmatpush1.bf16.msra.mxu0 0
          %1314 = vmatprep.subr.bf16.mxu0 0
          %1315 = vmatpush1.bf16.msra.mxu0 0
          %1316 = vmatprep.subr.bf16.mxu0 0
          %1317 = vmatpush1.bf16.msra.mxu0 0
          %1318 = vmatprep.subr.bf16.mxu0 0
          %1319 = vmatpush1.bf16.msra.mxu0 0
          %1320 = vmatprep.subr.bf16.mxu0 0
          %1321 = vmatpush1.bf16.msra.mxu0 0
          %1322 = vmatprep.subr.bf16.mxu0 0
          %1323 = vmatpush1.bf16.msra.mxu0 0
          %1324 = vmatprep.subr.bf16.mxu0 0
          %1325 = vmatpush1.bf16.msra.mxu0 0
          %1326 = vmatprep.subr.bf16.mxu0 0
          %1327 = vmatpush1.bf16.msra.mxu0 0
          %1328 = vmatprep.subr.bf16.mxu0 0
          %1329 = vmatpush1.bf16.msra.mxu0 0
          %1330 = vmatprep.subr.bf16.mxu0 0
          %1331 = vmatpush1.bf16.msra.mxu0 0
          %1332 = vmatprep.mubr.bf16.mxu0 0
          %1333 = vmatmul.mubr.bf16.gmra.mrb[0].mxu0 %v1298
          %v1334 = vpop.f32.mrb[0].mxu0
          %v1335 = vadd.f32 %v1246, %v1334
          %v1336 = vpop.f32.mrb[0].mxu0
          %v1337 = vadd.f32 %v1248, %v1336
          %v1338 = vpop.f32.mrb[0].mxu0
          %v1339 = vadd.f32 %v1250, %v1338
          %v1340 = vpop.f32.mrb[0].mxu0
          %v1341 = vadd.f32 %v1252, %v1340
          %1342 = vdwg.mxu0
          %1343 = vmatprep.subr.bf16.mxu0 %v1083
          %1344 = vmatpush1.bf16.msra.mxu0 %v1082
          %1345 = vmatprep.subr.bf16.mxu0 %v1087
          %1346 = vmatpush1.bf16.msra.mxu0 %v1086
          %1347 = vmatprep.subr.bf16.mxu0 %v1091
          %1348 = vmatpush1.bf16.msra.mxu0 %v1090
          %1349 = vmatprep.subr.bf16.mxu0 %v1095
          %1350 = vmatpush1.bf16.msra.mxu0 %v1094
          %1351 = vmatprep.subr.bf16.mxu0 0
          %1352 = vmatpush1.bf16.msra.mxu0 0
          %1353 = vmatprep.subr.bf16.mxu0 0
          %1354 = vmatpush1.bf16.msra.mxu0 0
          %1355 = vmatprep.subr.bf16.mxu0 0
          %1356 = vmatpush1.bf16.msra.mxu0 0
          %1357 = vmatprep.subr.bf16.mxu0 0
          %1358 = vmatpush1.bf16.msra.mxu0 0
          %1359 = vmatprep.subr.bf16.mxu0 0
          %1360 = vmatpush1.bf16.msra.mxu0 0
          %1361 = vmatprep.subr.bf16.mxu0 0
          %1362 = vmatpush1.bf16.msra.mxu0 0
          %1363 = vmatprep.subr.bf16.mxu0 0
          %1364 = vmatpush1.bf16.msra.mxu0 0
          %1365 = vmatprep.subr.bf16.mxu0 0
          %1366 = vmatpush1.bf16.msra.mxu0 0
          %1367 = vmatprep.subr.bf16.mxu0 0
          %1368 = vmatpush1.bf16.msra.mxu0 0
          %1369 = vmatprep.subr.bf16.mxu0 0
          %1370 = vmatpush1.bf16.msra.mxu0 0
          %1371 = vmatprep.subr.bf16.mxu0 0
          %1372 = vmatpush1.bf16.msra.mxu0 0
          %1373 = vmatprep.subr.bf16.mxu0 0
          %1374 = vmatpush1.bf16.msra.mxu0 0
          %1375 = vmatprep.mubr.bf16.mxu0 0
          %1376 = vmatmul.mubr.bf16.gmra.mrb[0].mxu0 %v1298
          %v1377 = vpop.f32.mrb[0].mxu0
          %v1378 = vadd.f32 %v1289, %v1377
          %v1379 = vpop.f32.mrb[0].mxu0
          %v1380 = vadd.f32 %v1291, %v1379
          %v1381 = vpop.f32.mrb[0].mxu0
          %v1382 = vadd.f32 %v1293, %v1381
          %v1383 = vpop.f32.mrb[0].mxu0
          %v1384 = vadd.f32 %v1295, %v1383
          %1385 = vdwg.mxu0
          %v1386 = vunpack.c.h.b16 %v281
          %v1387 = vunpack.c.h.b16 %v282
          %v1388 = vpack.c.b16 %v1387, %v1386
          %1389 = vrot.lane.b32.xlu0 %v1080, 112
          %v1390 = vpop.permute.xlu0 %1389
          %1391 = vrot.lane.b32.xlu0 %v1081, 112
          %v1392 = vpop.permute.xlu0 %1391
          %1393 = vrot.lane.b32.xlu0 %v1082, 112
          %v1394 = vpop.permute.xlu0 %1393
          %1395 = vrot.lane.b32.xlu0 %v1083, 112
          %v1396 = vpop.permute.xlu0 %1395
          %1397 = vrot.lane.b32.xlu0 %v1103, 112
          %v1398 = vpop.permute.xlu0 %1397
          %1399 = vrot.lane.b32.xlu0 %v1084, 112
          %v1400 = vpop.permute.xlu0 %1399
          %1401 = vrot.lane.b32.xlu0 %v1085, 112
          %v1402 = vpop.permute.xlu0 %1401
          %1403 = vrot.lane.b32.xlu0 %v1086, 112
          %v1404 = vpop.permute.xlu0 %1403
          %1405 = vrot.lane.b32.xlu0 %v1087, 112
          %v1406 = vpop.permute.xlu0 %1405
          %1407 = vrot.lane.b32.xlu0 %v1104, 112
          %v1408 = vpop.permute.xlu0 %1407
          %1409 = vrot.lane.b32.xlu0 %v1088, 112
          %v1410 = vpop.permute.xlu0 %1409
          %1411 = vrot.lane.b32.xlu0 %v1089, 112
          %v1412 = vpop.permute.xlu0 %1411
          %1413 = vrot.lane.b32.xlu0 %v1090, 112
          %v1414 = vpop.permute.xlu0 %1413
          %1415 = vrot.lane.b32.xlu0 %v1091, 112
          %v1416 = vpop.permute.xlu0 %1415
          %1417 = vrot.lane.b32.xlu0 %v1105, 112
          %v1418 = vpop.permute.xlu0 %1417
          %1419 = vrot.lane.b32.xlu0 %v1092, 112
          %v1420 = vpop.permute.xlu0 %1419
          %1421 = vrot.lane.b32.xlu0 %v1093, 112
          %v1422 = vpop.permute.xlu0 %1421
          %1423 = vrot.lane.b32.xlu0 %v1094, 112
          %v1424 = vpop.permute.xlu0 %1423
          %1425 = vrot.lane.b32.xlu0 %v1095, 112
          %v1426 = vpop.permute.xlu0 %1425
          %1427 = vrot.lane.b32.xlu0 %v1106, 112
          %v1428 = vpop.permute.xlu0 %1427
          %vm1429 = vcmask 916480
          %v1430 = vsel %vm1429, %v1390, %v1392
          %v1431 = vsel %vm1429, %v1392, %v1394
          %v1432 = vsel %vm1429, %v1394, %v1396
          %v1433 = vsel %vm1429, %v1396, %v1398
          %v1434 = vsel %vm1429, %v1400, %v1402
          %v1435 = vsel %vm1429, %v1402, %v1404
          %v1436 = vsel %vm1429, %v1404, %v1406
          %v1437 = vsel %vm1429, %v1406, %v1408
          %v1438 = vsel %vm1429, %v1410, %v1412
          %v1439 = vsel %vm1429, %v1412, %v1414
          %v1440 = vsel %vm1429, %v1414, %v1416
          %v1441 = vsel %vm1429, %v1416, %v1418
          %v1442 = vsel %vm1429, %v1420, %v1422
          %v1443 = vsel %vm1429, %v1422, %v1424
          %v1444 = vsel %vm1429, %v1424, %v1426
          %v1445 = vsel %vm1429, %v1426, %v1428
          %v1463 = vsel %vm1207, %v1388, 0
          %1465 = vmatprep.subr.bf16.mxu0 %v1431
          %1466 = vmatpush1.bf16.msra.mxu0 %v1430
          %1467 = vmatprep.subr.bf16.mxu0 %v1435
          %1468 = vmatpush1.bf16.msra.mxu0 %v1434
          %1469 = vmatprep.subr.bf16.mxu0 %v1439
          %1470 = vmatpush1.bf16.msra.mxu0 %v1438
          %1471 = vmatprep.subr.bf16.mxu0 %v1443
          %1472 = vmatpush1.bf16.msra.mxu0 %v1442
          %1473 = vmatprep.subr.bf16.mxu0 0
          %1474 = vmatpush1.bf16.msra.mxu0 0
          %1475 = vmatprep.subr.bf16.mxu0 0
          %1476 = vmatpush1.bf16.msra.mxu0 0
          %1477 = vmatprep.subr.bf16.mxu0 0
          %1478 = vmatpush1.bf16.msra.mxu0 0
          %1479 = vmatprep.subr.bf16.mxu0 0
          %1480 = vmatpush1.bf16.msra.mxu0 0
          %1481 = vmatprep.subr.bf16.mxu0 0
          %1482 = vmatpush1.bf16.msra.mxu0 0
          %1483 = vmatprep.subr.bf16.mxu0 0
          %1484 = vmatpush1.bf16.msra.mxu0 0
          %1485 = vmatprep.subr.bf16.mxu0 0
          %1486 = vmatpush1.bf16.msra.mxu0 0
          %1487 = vmatprep.subr.bf16.mxu0 0
          %1488 = vmatpush1.bf16.msra.mxu0 0
          %1489 = vmatprep.subr.bf16.mxu0 0
          %1490 = vmatpush1.bf16.msra.mxu0 0
          %1491 = vmatprep.subr.bf16.mxu0 0
          %1492 = vmatpush1.bf16.msra.mxu0 0
          %1493 = vmatprep.subr.bf16.mxu0 0
          %1494 = vmatpush1.bf16.msra.mxu0 0
          %1495 = vmatprep.subr.bf16.mxu0 0
          %1496 = vmatpush1.bf16.msra.mxu0 0
          %1497 = vmatprep.mubr.bf16.mxu0 0
          %1498 = vmatmul.mubr.bf16.gmra.mrb[0].mxu0 %v1463
          %v1499 = vpop.f32.mrb[0].mxu0
          %v1500 = vadd.f32 0.0, %v1499
          %v1501 = vpop.f32.mrb[0].mxu0
          %v1502 = vadd.f32 0.0, %v1501
          %v1503 = vpop.f32.mrb[0].mxu0
          %v1504 = vadd.f32 0.0, %v1503
          %v1505 = vpop.f32.mrb[0].mxu0
          %v1506 = vadd.f32 0.0, %v1505
          %1507 = vdwg.mxu0
          %1508 = vmatprep.subr.bf16.mxu0 %v1433
          %1509 = vmatpush1.bf16.msra.mxu0 %v1432
          %1510 = vmatprep.subr.bf16.mxu0 %v1437
          %1511 = vmatpush1.bf16.msra.mxu0 %v1436
          %1512 = vmatprep.subr.bf16.mxu0 %v1441
          %1513 = vmatpush1.bf16.msra.mxu0 %v1440
          %1514 = vmatprep.subr.bf16.mxu0 %v1445
          %1515 = vmatpush1.bf16.msra.mxu0 %v1444
          %1516 = vmatprep.subr.bf16.mxu0 0
          %1517 = vmatpush1.bf16.msra.mxu0 0
          %1518 = vmatprep.subr.bf16.mxu0 0
          %1519 = vmatpush1.bf16.msra.mxu0 0
          %1520 = vmatprep.subr.bf16.mxu0 0
          %1521 = vmatpush1.bf16.msra.mxu0 0
          %1522 = vmatprep.subr.bf16.mxu0 0
          %1523 = vmatpush1.bf16.msra.mxu0 0
          %1524 = vmatprep.subr.bf16.mxu0 0
          %1525 = vmatpush1.bf16.msra.mxu0 0
          %1526 = vmatprep.subr.bf16.mxu0 0
          %1527 = vmatpush1.bf16.msra.mxu0 0
          %1528 = vmatprep.subr.bf16.mxu0 0
          %1529 = vmatpush1.bf16.msra.mxu0 0
          %1530 = vmatprep.subr.bf16.mxu0 0
          %1531 = vmatpush1.bf16.msra.mxu0 0
          %1532 = vmatprep.subr.bf16.mxu0 0
          %1533 = vmatpush1.bf16.msra.mxu0 0
          %1534 = vmatprep.subr.bf16.mxu0 0
          %1535 = vmatpush1.bf16.msra.mxu0 0
          %1536 = vmatprep.subr.bf16.mxu0 0
          %1537 = vmatpush1.bf16.msra.mxu0 0
          %1538 = vmatprep.subr.bf16.mxu0 0
          %1539 = vmatpush1.bf16.msra.mxu0 0
          %1540 = vmatprep.mubr.bf16.mxu0 0
          %1541 = vmatmul.mubr.bf16.gmra.mrb[0].mxu0 %v1463
          %v1542 = vpop.f32.mrb[0].mxu0
          %v1543 = vadd.f32 0.0, %v1542
          %v1544 = vpop.f32.mrb[0].mxu0
          %v1545 = vadd.f32 0.0, %v1544
          %v1546 = vpop.f32.mrb[0].mxu0
          %v1547 = vadd.f32 0.0, %v1546
          %v1548 = vpop.f32.mrb[0].mxu0
          %v1549 = vadd.f32 0.0, %v1548
          %1550 = vdwg.mxu0
          %v1551 = vadd.f32 %v1335, %v1500
          %v1552 = vadd.f32 %v1337, %v1502
          %v1553 = vadd.f32 %v1378, %v1543
          %v1554 = vadd.f32 %v1380, %v1545
          %v1555 = vadd.f32 %v1339, %v1504
          %v1556 = vadd.f32 %v1341, %v1506
          %v1557 = vadd.f32 %v1382, %v1547
          %v1558 = vadd.f32 %v1384, %v1549
          %1559 = vrot.lane.b32.xlu0 %v1388, 64
          %v1560 = vpop.permute.xlu0 %1559
          %1561 = vrot.lane.b32.xlu0 %v1080, 104
          %v1562 = vpop.permute.xlu0 %1561
          %1563 = vrot.lane.b32.xlu0 %v1081, 104
          %v1564 = vpop.permute.xlu0 %1563
          %1565 = vrot.lane.b32.xlu0 %v1082, 104
          %v1566 = vpop.permute.xlu0 %1565
          %1567 = vrot.lane.b32.xlu0 %v1083, 104
          %v1568 = vpop.permute.xlu0 %1567
          %1569 = vrot.lane.b32.xlu0 %v1103, 104
          %v1570 = vpop.permute.xlu0 %1569
          %1571 = vrot.lane.b32.xlu0 %v1084, 104
          %v1572 = vpop.permute.xlu0 %1571
          %1573 = vrot.lane.b32.xlu0 %v1085, 104
          %v1574 = vpop.permute.xlu0 %1573
          %1575 = vrot.lane.b32.xlu0 %v1086, 104
          %v1576 = vpop.permute.xlu0 %1575
          %1577 = vrot.lane.b32.xlu0 %v1087, 104
          %v1578 = vpop.permute.xlu0 %1577
          %1579 = vrot.lane.b32.xlu0 %v1104, 104
          %v1580 = vpop.permute.xlu0 %1579
          %1581 = vrot.lane.b32.xlu0 %v1088, 104
          %v1582 = vpop.permute.xlu0 %1581
          %1583 = vrot.lane.b32.xlu0 %v1089, 104
          %v1584 = vpop.permute.xlu0 %1583
          %1585 = vrot.lane.b32.xlu0 %v1090, 104
          %v1586 = vpop.permute.xlu0 %1585
          %1587 = vrot.lane.b32.xlu0 %v1091, 104
          %v1588 = vpop.permute.xlu0 %1587
          %1589 = vrot.lane.b32.xlu0 %v1105, 104
          %v1590 = vpop.permute.xlu0 %1589
          %vm1591 = vcmask 850944
          %v1592 = vsel %vm1591, %v1562, %v1564
          %v1593 = vsel %vm1591, %v1564, %v1566
          %v1594 = vsel %vm1591, %v1566, %v1568
          %v1595 = vsel %vm1591, %v1568, %v1570
          %v1596 = vsel %vm1591, %v1572, %v1574
          %v1597 = vsel %vm1591, %v1574, %v1576
          %v1598 = vsel %vm1591, %v1576, %v1578
          %v1599 = vsel %vm1591, %v1578, %v1580
          %v1600 = vsel %vm1591, %v1582, %v1584
          %v1601 = vsel %vm1591, %v1584, %v1586
          %v1602 = vsel %vm1591, %v1586, %v1588
          %v1603 = vsel %vm1591, %v1588, %v1590
          %vm1616 = vcmask 392192
          %v1618 = vsel %vm1616, %v1560, 0
          %1620 = vmatprep.subr.bf16.mxu0 %v1593
          %1621 = vmatpush1.bf16.msra.mxu0 %v1592
          %1622 = vmatprep.subr.bf16.mxu0 %v1597
          %1623 = vmatpush1.bf16.msra.mxu0 %v1596
          %1624 = vmatprep.subr.bf16.mxu0 %v1601
          %1625 = vmatpush1.bf16.msra.mxu0 %v1600
          %1626 = vmatprep.subr.bf16.mxu0 0
          %1627 = vmatpush1.bf16.msra.mxu0 0
          %1628 = vmatprep.subr.bf16.mxu0 0
          %1629 = vmatpush1.bf16.msra.mxu0 0
          %1630 = vmatprep.subr.bf16.mxu0 0
          %1631 = vmatpush1.bf16.msra.mxu0 0
          %1632 = vmatprep.subr.bf16.mxu0 0
          %1633 = vmatpush1.bf16.msra.mxu0 0
          %1634 = vmatprep.subr.bf16.mxu0 0
          %1635 = vmatpush1.bf16.msra.mxu0 0
          %1636 = vmatprep.subr.bf16.mxu0 0
          %1637 = vmatpush1.bf16.msra.mxu0 0
          %1638 = vmatprep.subr.bf16.mxu0 0
          %1639 = vmatpush1.bf16.msra.mxu0 0
          %1640 = vmatprep.subr.bf16.mxu0 0
          %1641 = vmatpush1.bf16.msra.mxu0 0
          %1642 = vmatprep.subr.bf16.mxu0 0
          %1643 = vmatpush1.bf16.msra.mxu0 0
          %1644 = vmatprep.subr.bf16.mxu0 0
          %1645 = vmatpush1.bf16.msra.mxu0 0
          %1646 = vmatprep.subr.bf16.mxu0 0
          %1647 = vmatpush1.bf16.msra.mxu0 0
          %1648 = vmatprep.subr.bf16.mxu0 0
          %1649 = vmatpush1.bf16.msra.mxu0 0
          %1650 = vmatprep.subr.bf16.mxu0 0
          %1651 = vmatpush1.bf16.msra.mxu0 0
          %1652 = vmatprep.mubr.bf16.mxu0 0
          %1653 = vmatmul.mubr.bf16.gmra.mrb[0].mxu0 %v1618
          %v1654 = vpop.f32.mrb[0].mxu0
          %v1655 = vadd.f32 0.0, %v1654
          %v1656 = vpop.f32.mrb[0].mxu0
          %v1657 = vadd.f32 0.0, %v1656
          %v1658 = vpop.f32.mrb[0].mxu0
          %v1659 = vadd.f32 0.0, %v1658
          %v1660 = vpop.f32.mrb[0].mxu0
          %v1661 = vadd.f32 0.0, %v1660
          %1662 = vdwg.mxu0
          %1663 = vmatprep.subr.bf16.mxu0 %v1595
          %1664 = vmatpush1.bf16.msra.mxu0 %v1594
          %1665 = vmatprep.subr.bf16.mxu0 %v1599
          %1666 = vmatpush1.bf16.msra.mxu0 %v1598
          %1667 = vmatprep.subr.bf16.mxu0 %v1603
          %1668 = vmatpush1.bf16.msra.mxu0 %v1602
          %1669 = vmatprep.subr.bf16.mxu0 0
          %1670 = vmatpush1.bf16.msra.mxu0 0
          %1671 = vmatprep.subr.bf16.mxu0 0
          %1672 = vmatpush1.bf16.msra.mxu0 0
          %1673 = vmatprep.subr.bf16.mxu0 0
          %1674 = vmatpush1.bf16.msra.mxu0 0
          %1675 = vmatprep.subr.bf16.mxu0 0
          %1676 = vmatpush1.bf16.msra.mxu0 0
          %1677 = vmatprep.subr.bf16.mxu0 0
          %1678 = vmatpush1.bf16.msra.mxu0 0
          %1679 = vmatprep.subr.bf16.mxu0 0
          %1680 = vmatpush1.bf16.msra.mxu0 0
          %1681 = vmatprep.subr.bf16.mxu0 0
          %1682 = vmatpush1.bf16.msra.mxu0 0
          %1683 = vmatprep.subr.bf16.mxu0 0
          %1684 = vmatpush1.bf16.msra.mxu0 0
          %1685 = vmatprep.subr.bf16.mxu0 0
          %1686 = vmatpush1.bf16.msra.mxu0 0
          %1687 = vmatprep.subr.bf16.mxu0 0
          %1688 = vmatpush1.bf16.msra.mxu0 0
          %1689 = vmatprep.subr.bf16.mxu0 0
          %1690 = vmatpush1.bf16.msra.mxu0 0
          %1691 = vmatprep.subr.bf16.mxu0 0
          %1692 = vmatpush1.bf16.msra.mxu0 0
          %1693 = vmatprep.subr.bf16.mxu0 0
          %1694 = vmatpush1.bf16.msra.mxu0 0
          %1695 = vmatprep.mubr.bf16.mxu0 0
          %1696 = vmatmul.mubr.bf16.gmra.mrb[0].mxu0 %v1618
          %v1697 = vpop.f32.mrb[0].mxu0
          %v1698 = vadd.f32 0.0, %v1697
          %v1699 = vpop.f32.mrb[0].mxu0
          %v1700 = vadd.f32 0.0, %v1699
          %v1701 = vpop.f32.mrb[0].mxu0
          %v1702 = vadd.f32 0.0, %v1701
          %v1703 = vpop.f32.mrb[0].mxu0
          %v1704 = vadd.f32 0.0, %v1703
          %1705 = vdwg.mxu0
          %v1706 = vadd.f32 %v1551, %v1655
          %v1707 = vadd.f32 %v1552, %v1657
          %v1708 = vadd.f32 %v1553, %v1698
          %v1709 = vadd.f32 %v1554, %v1700
          %v1710 = vadd.f32 %v1555, %v1659
          %v1711 = vadd.f32 %v1556, %v1661
          %v1712 = vadd.f32 %v1557, %v1702
          %v1713 = vadd.f32 %v1558, %v1704
          %1715 = vset.pattern.permute.xlu0 0
          %1716 = vperm.xlu0 %1715, %v283
          %v1717 = vpop.permute.xlu0 %1716
          %1720 = vset.pattern.permute.xlu0 0
          %1721 = vperm.xlu0 %1720, %v284
          %v1722 = vpop.permute.xlu0 %1721
          %v1724 = vadd.f32 %v1706, %v1717
          %v1725 = vadd.f32 %v1707, %v1717
          %v1726 = vadd.f32 %v1708, %v1717
          %v1727 = vadd.f32 %v1709, %v1717
          %v1728 = vadd.f32 %v1710, %v1722
          %v1729 = vadd.f32 %v1711, %v1722
          %v1730 = vadd.f32 %v1712, %v1722
          %v1731 = vadd.f32 %v1713, %v1722
          %v1732 = vmax.f32 %v1724, %v1728
          %v1733 = vrot.slane %v1732, 4
          %v1734 = vmax.f32 %v1732, %v1733
          %v1735 = vrot.slane %v1734, 2
          %v1736 = vmax.f32 %v1734, %v1735
          %v1737 = vrot.slane %v1736, 1
          %v1738 = vmax.f32 %v1736, %v1737
          %v1739 = vmax.f32 %v1725, %v1729
          %v1740 = vrot.slane %v1739, 4
          %v1741 = vmax.f32 %v1739, %v1740
          %v1742 = vrot.slane %v1741, 2
          %v1743 = vmax.f32 %v1741, %v1742
          %v1744 = vrot.slane %v1743, 1
          %v1745 = vmax.f32 %v1743, %v1744
          %v1746 = vmax.f32 %v1726, %v1730
          %v1747 = vrot.slane %v1746, 4
          %v1748 = vmax.f32 %v1746, %v1747
          %v1749 = vrot.slane %v1748, 2
          %v1750 = vmax.f32 %v1748, %v1749
          %v1751 = vrot.slane %v1750, 1
          %v1752 = vmax.f32 %v1750, %v1751
          %v1753 = vmax.f32 %v1727, %v1731
          %v1754 = vrot.slane %v1753, 4
          %v1755 = vmax.f32 %v1753, %v1754
          %v1756 = vrot.slane %v1755, 2
          %v1757 = vmax.f32 %v1755, %v1756
          %v1758 = vrot.slane %v1757, 1
          %v1759 = vmax.f32 %v1757, %v1758
          %v1760 = vmin.f32 %v1724, %v1728
          %v1761 = vrot.slane %v1760, 4
          %v1762 = vmin.f32 %v1760, %v1761
          %v1763 = vrot.slane %v1762, 2
          %v1764 = vmin.f32 %v1762, %v1763
          %v1765 = vrot.slane %v1764, 1
          %v1766 = vmin.f32 %v1764, %v1765
          %v1767 = vmin.f32 %v1725, %v1729
          %v1768 = vrot.slane %v1767, 4
          %v1769 = vmin.f32 %v1767, %v1768
          %v1770 = vrot.slane %v1769, 2
          %v1771 = vmin.f32 %v1769, %v1770
          %v1772 = vrot.slane %v1771, 1
          %v1773 = vmin.f32 %v1771, %v1772
          %v1774 = vmin.f32 %v1726, %v1730
          %v1775 = vrot.slane %v1774, 4
          %v1776 = vmin.f32 %v1774, %v1775
          %v1777 = vrot.slane %v1776, 2
          %v1778 = vmin.f32 %v1776, %v1777
          %v1779 = vrot.slane %v1778, 1
          %v1780 = vmin.f32 %v1778, %v1779
          %v1781 = vmin.f32 %v1727, %v1731
          %v1782 = vrot.slane %v1781, 4
          %v1783 = vmin.f32 %v1781, %v1782
          %v1784 = vrot.slane %v1783, 2
          %v1785 = vmin.f32 %v1783, %v1784
          %v1786 = vrot.slane %v1785, 1
          %v1787 = vmin.f32 %v1785, %v1786
          %v1788 = vsub.f32 %v1738, %v1766
          %v1789 = vsub.f32 %v1745, %v1773
          %v1790 = vsub.f32 %v1752, %v1780
          %v1791 = vsub.f32 %v1759, %v1787
          %v1796 = vcombine.low %v1788, %v1789
          %v1797 = vcombine.low %v1790, %v1791
          %v1799 = vunpack.c.l.s4 1966171168
          %v1800 = vunpack.c.0.s8 %v1799
          %v1801 = vlaneseq
          %v1802 = vshrl.u32 %v1801, 7
          %v1803 = vsub.s32 %v1800, %v1802
          %v1804 = vrot.slane %v1796, %v1803
          %v1806 = vunpack.c.l.s4 1966171168
          %v1807 = vunpack.c.0.s8 %v1806
          %v1808 = vlaneseq
          %v1809 = vshrl.u32 %v1808, 7
          %v1810 = vsub.s32 %v1807, %v1809
          %v1811 = vrot.slane %v1797, %v1810
          %v1812 = vcombine.low %v1804, %v1811
          %v1814 = vunpack.c.l.s4 1966171168
          %v1815 = vunpack.c.0.s8 %v1814
          %v1816 = vlaneseq
          %v1817 = vshrl.u32 %v1816, 7
          %v1818 = vsub.s32 %v1815, %v1817
          %v1819 = vrot.slane %v1812, %v1818
          %s1821 = scalar_lea.vmem %s269, %s292 [#allocation2]
          %v1822 = vlaneseq
          %vm1823 = vcmp.ge.s32.totalorder %v1822, 0
          %vm1824 = vcmp.lt.s32.totalorder %v1822, 512
          %vm1825 = vmand %vm1823, %vm1824
          %1826 = vst.msk [vmem:[%s1821] sm:$0xf] %vm1825, %v1819
        $region53: #{tpu_custom_call.1} parent=47 // loop_footer
          %s290 = sadd.s32 1, %s286
        $region54: #{tpu_custom_call.1} parent=47 // loop_footer_branch
          %285 = sbr.rel target = $region50
        $region55: #{tpu_custom_call.1} parent=47 // loop_exit
          _
        %s1827 = sand.u32 %s181, 1
        %s1828 = scalar_lea.sflag [#allocation3], %s1827
        %s1829 = sand.u32 %s181, 1
        %s1830 = smul.addr %s1829, 28
        %s1831 = scalar_lea.vmem [#allocation2], %s1830
        // Predicated region
        $region56: #{tpu_custom_call.1} parent=47 // pred_check
          %p1832 = pneg %p191
        $region57: #{tpu_custom_call.1} parent=47 // pred_check_branch
          %1834 = sbr.rel (%p1832) target = $region59
        $region58: #{tpu_custom_call.1} parent=47 // pred_region
          %s1836 = ssub.s32 448, 448
          %1837 = vsyncadd %s1828, %s1836
          %s1838 = smul.addr %s21, 28
          %s1839 = smul.addr %s1838, 16
          %s1840 = scalar_lea.hbm %s7, %s1839
          %s1842 = sshll.u32 %s1831, 4
          %s1843 = int_to_ptr.vmem [resolvable:$true] %s1842
          %1845 = dma.vmem_to_hbm [thread:$0]  %s1843, 448, %s1840, %s1828
        $region59: #{tpu_custom_call.1} parent=47 // pred_fallthru
          _
      $region48: #{tpu_custom_call.1} parent=5 // pred_fallthru
        _
      %p1846 = scmp.le.s32.totalorder 2, %s16
      // Predicated region
      $region60: #{tpu_custom_call.1} parent=5 // pred_check
        %p1847 = pneg %p1846
      $region61: #{tpu_custom_call.1} parent=5 // pred_check_branch
        %1849 = sbr.rel (%p1847) target = $region63
      $region62: #{tpu_custom_call.1} parent=5 // pred_region
        %s1850 = ssub.s32 %s16, 2
        // Predicated region
        $region64: #{tpu_custom_call.1} parent=62 // pred_check
          %p1851 = pneg %p197
        $region65: #{tpu_custom_call.1} parent=62 // pred_check_branch
          %1853 = sbr.rel (%p1851) target = $region67
        $region66: #{tpu_custom_call.1} parent=62 // pred_region
          %s1854 = sand.u32 %s182, 1
          %s1855 = scalar_lea.sflag [#allocation3], %s1854
          %s1856 = sand.u32 %s182, 1
          %s1857 = smul.addr %s1856, 28
          %s1858 = scalar_lea.vmem [#allocation2], %s1857
          %1859 = dma.done %s1855, 448
        $region67: #{tpu_custom_call.1} parent=62 // pred_fallthru
          _
      $region63: #{tpu_custom_call.1} parent=5 // pred_fallthru
        _
    $region6: #{tpu_custom_call.1} parent=1 // loop_footer
      %s20 = sadd.s32 1, %s16
    $region7: #{tpu_custom_call.1} parent=1 // loop_footer_branch
      %15 = sbr.rel target = $region3
    $region8: #{tpu_custom_call.1} parent=1 // loop_exit
      _
    %1860 = vsyncpa [#allocation3], 1
    %s1861 = scalar_lea.sflag [#allocation3], 1
    %1862 = vsyncpa %s1861, 1

</llo_original>
